<compile_context>
chip_gen: v6e
topology: v6e:2x2x1
jax: 0.10.0
libtpu: 0.0.40
codegen_flags: <defaults>
</compile_context>

<pallas_src>
import numpy as np
import jax
import jax.numpy as jnp
from jax.experimental import pallas as pl
from jax.experimental.pallas import tpu as pltpu

CHANNEL_N = 16
CELL_FIRE_RATE = 0.5
HIDDEN = 32


def _perception_kernels(angle=0.0):
    identify = np.outer([0.0, 1.0, 0.0], [0.0, 1.0, 0.0]).astype(np.float32)
    sobel = (np.outer([1.0, 2.0, 1.0], [-1.0, 0.0, 1.0]) / 8.0).astype(np.float32)
    dx_k, dy_k = sobel, sobel.T
    c, s = float(np.cos(angle)), float(np.sin(angle))
    kx = (c * dx_k - s * dy_k).astype(np.float32)
    ky = (s * dx_k + c * dy_k).astype(np.float32)
    return identify, kx, ky


def _default_images_per_step(B):
    """v5e/v6e have one TensorCore: fuse the whole batch into the lane axis.
    v7x has two TensorCores: keep >= 2 parallel grid steps when possible."""
    try:
        kind = jax.devices()[0].device_kind.lower()
    except Exception:
        kind = ""
    if "v7" in kind and B % 2 == 0:
        return max(B // 2, 1)
    return B


def _make_cell_kernel(H, W, C, G, T, kx, ky, fire_rate, step_size):
    N = H * W          # pixels per image
    GN = G * N         # fused lane width (G images side by side)
    # Bake the tiny 3x3 perception kernels in as compile-time scalar constants.
    kx = [[float(v) for v in row] for row in kx]
    ky = [[float(v) for v in row] for row in ky]
    offsets = [(da, db) for da in (-1, 0, 1) for db in (-1, 0, 1)
               if (da, db) != (0, 0)]

    def kernel(x_ref, rand_ref, w1_ref, b1_ref, w2_ref, b2_ref, o_ref, state_ref):
        # --- per-image boundary masks: lane-only, computed ONCE per grid step --
        # Using p = idx % N makes the zero "padding" per image, so taps never
        # leak between images fused on the lane axis.
        idx = jax.lax.broadcasted_iota(jnp.int32, (1, GN), 1)
        p = idx % N
        col = p % W
        row_ok = {-1: p >= W, 0: None, 1: p < (H - 1) * W}
        col_ok = {-1: col > 0, 0: None, 1: col < (W - 1)}
        masks = {}
        for da, db in offsets:
            r, c = row_ok[da], col_ok[db]
            ok = r if c is None else (c if r is None else jnp.logical_and(r, c))
            masks[(da, db)] = ok.astype(jnp.float32)   # 0/1, broadcasts over sublanes

        def shifted(arr, da, db):
            # shifted[q] == arr[q + da*W + db] (wrapped taps get masked to zero)
            s = da * W + db
            return pltpu.roll(arr, (-s) % GN, 1)

        # --- CA state stays resident in VMEM across the fused update steps ----
        state_ref[...] = x_ref[...]

        @pl.loop(0, T)
        def _(t):
            x2 = state_ref[...]                      # (C, GN)
            rand = rand_ref[t]                       # (1, GN) randoms for step t

            # perception: depthwise 3x3 cross-correlations via roll + mask
            xv = None
            yv = None
            for da in (-1, 0, 1):
                for db in (-1, 0, 1):
                    cx = kx[da + 1][db + 1]
                    cy = ky[da + 1][db + 1]
                    if cx == 0.0 and cy == 0.0:
                        continue
                    if (da, db) == (0, 0):
                        tap = x2
                    else:
                        tap = shifted(x2, da, db) * masks[(da, db)]
                    if cx != 0.0:
                        xv = cx * tap if xv is None else xv + cx * tap
                    if cy != 0.0:
                        yv = cy * tap if yv is None else yv + cy * tap
            if xv is None:
                xv = jnp.zeros((C, GN), jnp.float32)
            if yv is None:
                yv = jnp.zeros((C, GN), jnp.float32)

            # update net: ONE (hid,3C)@(3C,GN) matmul -> ReLU -> (C,hid)@(hid,GN)
            slab = jnp.concatenate([x2, xv, yv], axis=0)        # (3C, GN)
            h = jnp.dot(w1_ref[...], slab,
                        preferred_element_type=jnp.float32) + b1_ref[...]
            h = jnp.maximum(h, 0.0)
            dx = (jnp.dot(w2_ref[...], h,
                          preferred_element_type=jnp.float32) + b2_ref[...]) * step_size

            # stochastic fire mask
            upd = (rand <= fire_rate).astype(jnp.float32)       # (1, GN)
            xn = x2 + dx * upd

            # living masks: pool pre- and post-update alpha together (2, GN).
            # Zero fill is equivalent to torch's -inf pool padding because the
            # aliveness threshold 0.1 > 0.
            alpha = jnp.concatenate([x2[3:4, :], xn[3:4, :]], axis=0)   # (2, GN)
            m = alpha
            for off in offsets:
                m = jnp.maximum(m, shifted(alpha, *off) * masks[off])
            life = jnp.logical_and(m[0:1, :] > 0.1,
                                   m[1:2, :] > 0.1).astype(jnp.float32)  # (1, GN)

            state_ref[...] = xn * life

        o_ref[...] = state_ref[...]

    return kernel


def cell_forward(x_nchw, rand, w1s, b1, w2, b2, *, angle=0.0,
                 fire_rate=CELL_FIRE_RATE, step_size=1.0, images_per_step=None):
    """x_nchw: (B, C, H, W) float32 (PyTorch layout).
    rand: (B, 1, H, W) U[0,1) for a single CA step (== module forward), or
          (T, B, 1, H, W) for T CA steps fused into one pallas_call.
    w1s: (3, hid, C) stacked [identity|dx|dy] blocks of the first 1x1 conv,
    b1: (hid, 1), w2: (C, hid), b2: (C, 1).  Returns (B, C, H, W)."""
    B, C, H, W = x_nchw.shape
    N = H * W
    if rand.ndim == 4:
        rand = rand[None]                       # single step
    T = rand.shape[0]
    assert rand.shape == (T, B, 1, H, W)

    _, kx, ky = _perception_kernels(angle)
    hid = w1s.shape[1]

    if images_per_step is None:
        images_per_step = _default_images_per_step(B)
    G = int(images_per_step)
    assert B % G == 0
    num_blocks = B // G
    GN = G * N
    assert C % 8 == 0 and (GN % 128 == 0 or num_blocks == 1), \
        "fused lane tile must respect the (8,128) layout"

    # Lane-dense layout: channels on sublanes, fused (image, pixel) axis on
    # lanes.  These permutations touch a few tens of KB, run once in XLA
    # outside the kernel, and buy full-width vector loads/stores inside it.
    x2 = (x_nchw.astype(jnp.float32).reshape(B, C, N)
          .transpose(1, 0, 2).reshape(C, B * N))
    rand2 = (rand.astype(jnp.float32).reshape(T, B, 1, N)
             .transpose(0, 2, 1, 3).reshape(T, 1, B * N))
    # Pre-concat the three 1x1-conv blocks -> one K=3C MXU matmul in-kernel.
    w1cat = jnp.concatenate([w1s[0], w1s[1], w1s[2]], axis=1).astype(jnp.float32)

    kernel = _make_cell_kernel(H, W, C, G, T, kx, ky,
                               float(fire_rate), float(step_size))

    # NOTE: for large images, switch to row strips with a 1-row halo and
    # re-derive the strip height against v7x's 64 MiB VMEM (32 MiB default
    # scoped limit); unnecessary at 16x16 where a whole fused batch is ~32 KB.
    out = pl.pallas_call(
        kernel,
        out_shape=jax.ShapeDtypeStruct((C, B * N), jnp.float32),
        grid=(num_blocks,),
        in_specs=[
            pl.BlockSpec((C, GN), lambda s: (0, s)),
            pl.BlockSpec((T, 1, GN), lambda s: (0, 0, s)),
            pl.BlockSpec((hid, 3 * C), lambda s: (0, 0)),
            pl.BlockSpec((hid, 1), lambda s: (0, 0)),
            pl.BlockSpec((C, hid), lambda s: (0, 0)),
            pl.BlockSpec((C, 1), lambda s: (0, 0)),
        ],
        out_specs=pl.BlockSpec((C, GN), lambda s: (0, s)),
        scratch_shapes=[pltpu.VMEM((C, GN), jnp.float32)],
        compiler_params=pltpu.CompilerParams(dimension_semantics=("parallel",)),
    )(x2, rand2, w1cat, b1.astype(jnp.float32),
      w2.astype(jnp.float32), b2.astype(jnp.float32))

    return out.reshape(C, B, N).transpose(1, 0, 2).reshape(B, C, H, W)


def cell_reference(x_nchw, rand, w1s, b1, w2, b2, *, angle=0.0,
                   fire_rate=CELL_FIRE_RATE, step_size=1.0):
    """Pure-JAX reference for one forward pass (sanity check)."""
    B, C, H, W = x_nchw.shape
    _, kx, ky = _perception_kernels(angle)
    x = x_nchw.astype(jnp.float32)
    xp = jnp.pad(x, ((0, 0), (0, 0), (1, 1), (1, 1)))

    def dw(k):
        out = jnp.zeros_like(x)
        for a in range(3):
            for b in range(3):
                out = out + float(k[a, b]) * xp[:, :, a:a + H, b:b + W]
        return out

    iv, xv, yv = x, dw(kx), dw(ky)
    h = (jnp.einsum("oc,bchw->bohw", w1s[0], iv)
         + jnp.einsum("oc,bchw->bohw", w1s[1], xv)
         + jnp.einsum("oc,bchw->bohw", w1s[2], yv)
         + b1[:, 0][None, :, None, None])
    h = jnp.maximum(h, 0.0)
    dx = (jnp.einsum("oc,bchw->bohw", w2, h)
          + b2[:, 0][None, :, None, None]) * step_size
    upd = (rand.astype(jnp.float32) <= fire_rate).astype(jnp.float32)
    xn = x + dx * upd

    def life(z):
        a = z[:, 3:4]
        ap = jnp.pad(a, ((0, 0), (0, 0), (1, 1), (1, 1)),
                     constant_values=-jnp.inf)
        m = ap[:, :, 1:H + 1, 1:W + 1]
        for di in range(3):
            for dj in range(3):
                m = jnp.maximum(m, ap[:, :, di:di + H, dj:dj + W])
        return m > 0.1

    mask = jnp.logical_and(life(x), life(xn)).astype(jnp.float32)
    return xn * mask


if __name__ == "__main__":
    B, C, H, W, hid = 2, CHANNEL_N, 16, 16, HIDDEN

    key = jax.random.PRNGKey(0)
    kx_, kr, k1, k2, k3, k4 = jax.random.split(key, 6)

    x = jax.random.normal(kx_, (B, C, H, W), jnp.float32) * 0.5
    rand = jax.random.uniform(kr, (B, 1, H, W), jnp.float32)   # fire-mask randoms
    w1s = jax.random.normal(k1, (3, hid, C), jnp.float32) * 0.1
    b1 = jax.random.normal(k2, (hid, 1), jnp.float32) * 0.1
    w2 = jax.random.normal(k3, (C, hid), jnp.float32) * 0.1
    b2 = jax.random.normal(k4, (C, 1), jnp.float32) * 0.1

    # --- single CA step (the module's forward) vs pure-JAX reference ----------
    out = cell_forward(x, rand, w1s, b1, w2, b2, angle=0.0, step_size=1.0)
    out = jax.block_until_ready(out)
    ref = cell_reference(x, rand, w1s, b1, w2, b2, angle=0.0, step_size=1.0)
    assert out.shape == (B, C, H, W)
    assert np.all(np.isfinite(np.asarray(out)))
    assert np.allclose(np.asarray(out), np.asarray(ref), atol=1e-2, rtol=1e-2)

    # --- T fused CA steps in a single pallas_call (state resident in VMEM) ----
    T = 4
    randT = jax.random.uniform(jax.random.PRNGKey(1), (T, B, 1, H, W), jnp.float32)
    outT = cell_forward(x, randT, w1s, b1, w2, b2, angle=0.0, step_size=1.0)
    outT = jax.block_until_ready(outT)
    step_by_step = x
    for t in range(T):
        step_by_step = cell_forward(step_by_step, randT[t], w1s, b1, w2, b2,
                                    angle=0.0, step_size=1.0)
    step_by_step = jax.block_until_ready(step_by_step)
    assert outT.shape == (B, C, H, W)
    assert np.all(np.isfinite(np.asarray(outT)))
    assert np.allclose(np.asarray(outT), np.asarray(step_by_step),
                       atol=1e-2, rtol=1e-2)

    print("KERNEL_OK")
</pallas_src>

<mosaic_0001>
module attributes {stable_mosaic.version = 11 : i64} {
  func.func @kernel(%arg0: i32, %arg1: memref<16x512xf32, #tpu.memory_space<vmem>>, %arg2: memref<1x1x512xf32, #tpu.memory_space<vmem>>, %arg3: memref<32x48xf32, #tpu.memory_space<vmem>>, %arg4: memref<32x1xf32, #tpu.memory_space<vmem>>, %arg5: memref<16x32xf32, #tpu.memory_space<vmem>>, %arg6: memref<16x1xf32, #tpu.memory_space<vmem>>, %arg7: memref<16x512xf32, #tpu.memory_space<vmem>>, %arg8: memref<16x512xf32, #tpu.memory_space<vmem>>) attributes {dimension_semantics = [#tpu.dimension_semantics<parallel>], iteration_bounds = array<i64: 1>, scalar_prefetch = 0 : i64, scratch_operands = 1 : i64, tpu.core_type = #tpu.core_type<tc>, window_params = [{transform_indices = @transform_0, window_bounds = array<i64: 16, 512>}, {transform_indices = @transform_1, window_bounds = array<i64: 1, 1, 512>}, {pipeline_mode = #tpu.pipeline_mode<synchronous>, transform_indices = @transform_2, window_bounds = array<i64: 32, 48>}, {pipeline_mode = #tpu.pipeline_mode<synchronous>, transform_indices = @transform_3, window_bounds = array<i64: 32, 1>}, {pipeline_mode = #tpu.pipeline_mode<synchronous>, transform_indices = @transform_4, window_bounds = array<i64: 16, 32>}, {pipeline_mode = #tpu.pipeline_mode<synchronous>, transform_indices = @transform_5, window_bounds = array<i64: 16, 1>}, {transform_indices = @transform_6, window_bounds = array<i64: 16, 512>}]} {
    %0 = tpu.iota {dimensions = array<i32: 1>} : vector<1x512xi32>
    %c256_i32 = arith.constant 256 : i32
    %c0_i32 = arith.constant 0 : i32
    %1 = arith.cmpi eq, %c256_i32, %c0_i32 : i32
    %c1_i32 = arith.constant 1 : i32
    %2 = arith.select %1, %c1_i32, %c256_i32 : i32
    %3 = vector.broadcast %2 : i32 to vector<1x512xi32>
    %4 = arith.remsi %0, %3 : vector<1x512xi32>
    %c0_i32_0 = arith.constant 0 : i32
    %5 = vector.broadcast %c0_i32_0 : i32 to vector<1x512xi32>
    %6 = arith.cmpi ne, %4, %5 : vector<1x512xi32>
    %c0_i32_1 = arith.constant 0 : i32
    %7 = vector.broadcast %c0_i32_1 : i32 to vector<1x512xi32>
    %8 = arith.cmpi slt, %4, %7 : vector<1x512xi32>
    %c0_i32_2 = arith.constant 0 : i32
    %9 = arith.cmpi slt, %2, %c0_i32_2 : i32
    %10 = vector.broadcast %9 : i1 to vector<1x512xi1>
    %11 = vector.broadcast %10 : vector<1x512xi1> to vector<1x512xi1>
    %12 = arith.xori %8, %11 : vector<1x512xi1>
    %13 = arith.andi %12, %6 : vector<1x512xi1>
    %14 = vector.broadcast %2 : i32 to vector<1x512xi32>
    %15 = arith.addi %4, %14 : vector<1x512xi32>
    %16 = arith.select %13, %15, %4 : vector<1x512xi1>, vector<1x512xi32>
    %c16_i32 = arith.constant 16 : i32
    %c0_i32_3 = arith.constant 0 : i32
    %17 = arith.cmpi eq, %c16_i32, %c0_i32_3 : i32
    %c1_i32_4 = arith.constant 1 : i32
    %18 = arith.select %17, %c1_i32_4, %c16_i32 : i32
    %19 = vector.broadcast %18 : i32 to vector<1x512xi32>
    %20 = arith.remsi %16, %19 : vector<1x512xi32>
    %c0_i32_5 = arith.constant 0 : i32
    %21 = vector.broadcast %c0_i32_5 : i32 to vector<1x512xi32>
    %22 = arith.cmpi ne, %20, %21 : vector<1x512xi32>
    %c0_i32_6 = arith.constant 0 : i32
    %23 = vector.broadcast %c0_i32_6 : i32 to vector<1x512xi32>
    %24 = arith.cmpi slt, %20, %23 : vector<1x512xi32>
    %c0_i32_7 = arith.constant 0 : i32
    %25 = arith.cmpi slt, %18, %c0_i32_7 : i32
    %26 = vector.broadcast %25 : i1 to vector<1x512xi1>
    %27 = vector.broadcast %26 : vector<1x512xi1> to vector<1x512xi1>
    %28 = arith.xori %24, %27 : vector<1x512xi1>
    %29 = arith.andi %28, %22 : vector<1x512xi1>
    %30 = vector.broadcast %18 : i32 to vector<1x512xi32>
    %31 = arith.addi %20, %30 : vector<1x512xi32>
    %32 = arith.select %29, %31, %20 : vector<1x512xi1>, vector<1x512xi32>
    %c16_i32_8 = arith.constant 16 : i32
    %33 = vector.broadcast %c16_i32_8 : i32 to vector<1x512xi32>
    %34 = arith.cmpi sge, %16, %33 : vector<1x512xi32>
    %c240_i32 = arith.constant 240 : i32
    %35 = vector.broadcast %c240_i32 : i32 to vector<1x512xi32>
    %36 = arith.cmpi slt, %16, %35 : vector<1x512xi32>
    %c0_i32_9 = arith.constant 0 : i32
    %37 = vector.broadcast %c0_i32_9 : i32 to vector<1x512xi32>
    %38 = arith.cmpi sgt, %32, %37 : vector<1x512xi32>
    %c15_i32 = arith.constant 15 : i32
    %39 = vector.broadcast %c15_i32 : i32 to vector<1x512xi32>
    %40 = arith.cmpi slt, %32, %39 : vector<1x512xi32>
    %41 = arith.andi %34, %38 : vector<1x512xi1>
    %42 = arith.extui %41 : vector<1x512xi1> to vector<1x512xi32>
    %43 = arith.sitofp %42 : vector<1x512xi32> to vector<1x512xf32>
    %44 = arith.extui %34 : vector<1x512xi1> to vector<1x512xi32>
    %45 = arith.sitofp %44 : vector<1x512xi32> to vector<1x512xf32>
    %46 = arith.andi %34, %40 : vector<1x512xi1>
    %47 = arith.extui %46 : vector<1x512xi1> to vector<1x512xi32>
    %48 = arith.sitofp %47 : vector<1x512xi32> to vector<1x512xf32>
    %49 = arith.extui %38 : vector<1x512xi1> to vector<1x512xi32>
    %50 = arith.sitofp %49 : vector<1x512xi32> to vector<1x512xf32>
    %51 = arith.extui %40 : vector<1x512xi1> to vector<1x512xi32>
    %52 = arith.sitofp %51 : vector<1x512xi32> to vector<1x512xf32>
    %53 = arith.andi %36, %38 : vector<1x512xi1>
    %54 = arith.extui %53 : vector<1x512xi1> to vector<1x512xi32>
    %55 = arith.sitofp %54 : vector<1x512xi32> to vector<1x512xf32>
    %56 = arith.extui %36 : vector<1x512xi1> to vector<1x512xi32>
    %57 = arith.sitofp %56 : vector<1x512xi32> to vector<1x512xf32>
    %58 = arith.andi %36, %40 : vector<1x512xi1>
    %59 = arith.extui %58 : vector<1x512xi1> to vector<1x512xi32>
    %60 = arith.sitofp %59 : vector<1x512xi32> to vector<1x512xf32>
    %c0 = arith.constant 0 : index
    %c0_10 = arith.constant 0 : index
    %61 = vector.load %arg1[%c0, %c0_10] : memref<16x512xf32, #tpu.memory_space<vmem>>, vector<16x512xf32>
    %c0_11 = arith.constant 0 : index
    %c0_12 = arith.constant 0 : index
    %62 = vector.load %arg8[%c0_11, %c0_12] : memref<16x512xf32, #tpu.memory_space<vmem>>, vector<16x512xf32>
    tpu.vector_store %arg8[%c0_11, %c0_12], %61 {strides = array<i32>} : memref<16x512xf32, #tpu.memory_space<vmem>>, vector<16x512xf32>,
    %c0_i32_13 = arith.constant 0 : i32
    %c1_i32_14 = arith.constant 1 : i32
    %63 = arith.muli %c0_i32_13, %c1_i32_14 : i32
    %c0_i32_15 = arith.constant 0 : i32
    %64 = arith.addi %c0_i32_15, %63 : i32
    %c0_16 = arith.constant 0 : index
    %c0_17 = arith.constant 0 : index
    %65 = vector.load %arg8[%c0_16, %c0_17] : memref<16x512xf32, #tpu.memory_space<vmem>>, vector<16x512xf32>
    %66 = arith.index_cast %64 : i32 to index
    %c0_18 = arith.constant 0 : index
    %c0_19 = arith.constant 0 : index
    %67 = vector.load %arg2[%66, %c0_18, %c0_19] : memref<1x1x512xf32, #tpu.memory_space<vmem>>, vector<1x1x512xf32>
    %68 = vector.shape_cast %67 : vector<1x1x512xf32> to vector<1x512xf32>
    %c17_i32 = arith.constant 17 : i32
    %69 = tpu.dynamic_rotate %65 by %c17_i32 dim 1 : vector<16x512xf32>, i32 -> vector<16x512xf32>
    %70 = vector.broadcast %43 : vector<1x512xf32> to vector<16x512xf32>
    %71 = arith.mulf %69, %70 : vector<16x512xf32>
    %cst = arith.constant -1.250000e-01 : f32
    %72 = vector.broadcast %cst : f32 to vector<16x512xf32>
    %73 = arith.mulf %72, %71 : vector<16x512xf32>
    %cst_20 = arith.constant -1.250000e-01 : f32
    %74 = vector.broadcast %cst_20 : f32 to vector<16x512xf32>
    %75 = arith.mulf %74, %71 : vector<16x512xf32>
    %c16_i32_21 = arith.constant 16 : i32
    %76 = tpu.dynamic_rotate %65 by %c16_i32_21 dim 1 : vector<16x512xf32>, i32 -> vector<16x512xf32>
    %77 = vector.broadcast %45 : vector<1x512xf32> to vector<16x512xf32>
    %78 = arith.mulf %76, %77 : vector<16x512xf32>
    %cst_22 = arith.constant -2.500000e-01 : f32
    %79 = vector.broadcast %cst_22 : f32 to vector<16x512xf32>
    %80 = arith.mulf %79, %78 : vector<16x512xf32>
    %81 = arith.addf %75, %80 : vector<16x512xf32>
    %c15_i32_23 = arith.constant 15 : i32
    %82 = tpu.dynamic_rotate %65 by %c15_i32_23 dim 1 : vector<16x512xf32>, i32 -> vector<16x512xf32>
    %83 = vector.broadcast %48 : vector<1x512xf32> to vector<16x512xf32>
    %84 = arith.mulf %82, %83 : vector<16x512xf32>
    %cst_24 = arith.constant 1.250000e-01 : f32
    %85 = vector.broadcast %cst_24 : f32 to vector<16x512xf32>
    %86 = arith.mulf %85, %84 : vector<16x512xf32>
    %87 = arith.addf %73, %86 : vector<16x512xf32>
    %cst_25 = arith.constant -1.250000e-01 : f32
    %88 = vector.broadcast %cst_25 : f32 to vector<16x512xf32>
    %89 = arith.mulf %88, %84 : vector<16x512xf32>
    %90 = arith.addf %81, %89 : vector<16x512xf32>
    %c1_i32_26 = arith.constant 1 : i32
    %91 = tpu.dynamic_rotate %65 by %c1_i32_26 dim 1 : vector<16x512xf32>, i32 -> vector<16x512xf32>
    %92 = vector.broadcast %50 : vector<1x512xf32> to vector<16x512xf32>
    %93 = arith.mulf %91, %92 : vector<16x512xf32>
    %cst_27 = arith.constant -2.500000e-01 : f32
    %94 = vector.broadcast %cst_27 : f32 to vector<16x512xf32>
    %95 = arith.mulf %94, %93 : vector<16x512xf32>
    %96 = arith.addf %87, %95 : vector<16x512xf32>
    %c511_i32 = arith.constant 511 : i32
    %97 = tpu.dynamic_rotate %65 by %c511_i32 dim 1 : vector<16x512xf32>, i32 -> vector<16x512xf32>
    %98 = vector.broadcast %52 : vector<1x512xf32> to vector<16x512xf32>
    %99 = arith.mulf %97, %98 : vector<16x512xf32>
    %cst_28 = arith.constant 2.500000e-01 : f32
    %100 = vector.broadcast %cst_28 : f32 to vector<16x512xf32>
    %101 = arith.mulf %100, %99 : vector<16x512xf32>
    %102 = arith.addf %96, %101 : vector<16x512xf32>
    %c497_i32 = arith.constant 497 : i32
    %103 = tpu.dynamic_rotate %65 by %c497_i32 dim 1 : vector<16x512xf32>, i32 -> vector<16x512xf32>
    %104 = vector.broadcast %55 : vector<1x512xf32> to vector<16x512xf32>
    %105 = arith.mulf %103, %104 : vector<16x512xf32>
    %cst_29 = arith.constant -1.250000e-01 : f32
    %106 = vector.broadcast %cst_29 : f32 to vector<16x512xf32>
    %107 = arith.mulf %106, %105 : vector<16x512xf32>
    %108 = arith.addf %102, %107 : vector<16x512xf32>
    %cst_30 = arith.constant 1.250000e-01 : f32
    %109 = vector.broadcast %cst_30 : f32 to vector<16x512xf32>
    %110 = arith.mulf %109, %105 : vector<16x512xf32>
    %111 = arith.addf %90, %110 : vector<16x512xf32>
    %c496_i32 = arith.constant 496 : i32
    %112 = tpu.dynamic_rotate %65 by %c496_i32 dim 1 : vector<16x512xf32>, i32 -> vector<16x512xf32>
    %113 = vector.broadcast %57 : vector<1x512xf32> to vector<16x512xf32>
    %114 = arith.mulf %112, %113 : vector<16x512xf32>
    %cst_31 = arith.constant 2.500000e-01 : f32
    %115 = vector.broadcast %cst_31 : f32 to vector<16x512xf32>
    %116 = arith.mulf %115, %114 : vector<16x512xf32>
    %117 = arith.addf %111, %116 : vector<16x512xf32>
    %c495_i32 = arith.constant 495 : i32
    %118 = tpu.dynamic_rotate %65 by %c495_i32 dim 1 : vector<16x512xf32>, i32 -> vector<16x512xf32>
    %119 = vector.broadcast %60 : vector<1x512xf32> to vector<16x512xf32>
    %120 = arith.mulf %118, %119 : vector<16x512xf32>
    %cst_32 = arith.constant 1.250000e-01 : f32
    %121 = vector.broadcast %cst_32 : f32 to vector<16x512xf32>
    %122 = arith.mulf %121, %120 : vector<16x512xf32>
    %123 = arith.addf %108, %122 : vector<16x512xf32>
    %cst_33 = arith.constant 1.250000e-01 : f32
    %124 = vector.broadcast %cst_33 : f32 to vector<16x512xf32>
    %125 = arith.mulf %124, %120 : vector<16x512xf32>
    %126 = arith.addf %117, %125 : vector<16x512xf32>
    %127 = tpu.concatenate %65, %123, %126 in 0 : vector<16x512xf32>, vector<16x512xf32>, vector<16x512xf32> -> vector<48x512xf32>
    %c0_34 = arith.constant 0 : index
    %c0_35 = arith.constant 0 : index
    %128 = vector.load %arg3[%c0_34, %c0_35] : memref<32x48xf32, #tpu.memory_space<vmem>>, vector<32x48xf32>
    %cst_36 = arith.constant dense<0.000000e+00> : vector<32x512xf32>
    %129 = tpu.matmul %128, %127, %cst_36 {dimension_numbers = #tpu.dot_dimension_numbers<[1], [0], [0], [1], [0, 0, 1, 1], [], []>} : vector<32x48xf32>, vector<48x512xf32>, vector<32x512xf32> -> vector<32x512xf32>
    %c0_37 = arith.constant 0 : index
    %c0_38 = arith.constant 0 : index
    %130 = vector.load %arg4[%c0_37, %c0_38] : memref<32x1xf32, #tpu.memory_space<vmem>>, vector<32x1xf32>
    %131 = vector.broadcast %130 : vector<32x1xf32> to vector<32x512xf32>
    %132 = arith.addf %129, %131 : vector<32x512xf32>
    %cst_39 = arith.constant 0.000000e+00 : f32
    %133 = vector.broadcast %cst_39 : f32 to vector<32x512xf32>
    %134 = arith.maximumf %132, %133 : vector<32x512xf32>
    %c0_40 = arith.constant 0 : index
    %c0_41 = arith.constant 0 : index
    %135 = vector.load %arg5[%c0_40, %c0_41] : memref<16x32xf32, #tpu.memory_space<vmem>>, vector<16x32xf32>
    %cst_42 = arith.constant dense<0.000000e+00> : vector<16x512xf32>
    %136 = tpu.matmul %135, %134, %cst_42 {dimension_numbers = #tpu.dot_dimension_numbers<[1], [0], [0], [1], [0, 0, 1, 1], [], []>} : vector<16x32xf32>, vector<32x512xf32>, vector<16x512xf32> -> vector<16x512xf32>
    %c0_43 = arith.constant 0 : index
    %c0_44 = arith.constant 0 : index
    %137 = vector.load %arg6[%c0_43, %c0_44] : memref<16x1xf32, #tpu.memory_space<vmem>>, vector<16x1xf32>
    %138 = vector.broadcast %137 : vector<16x1xf32> to vector<16x512xf32>
    %139 = arith.addf %136, %138 : vector<16x512xf32>
    %cst_45 = arith.constant 1.000000e+00 : f32
    %140 = vector.broadcast %cst_45 : f32 to vector<16x512xf32>
    %141 = arith.mulf %139, %140 : vector<16x512xf32>
    %cst_46 = arith.constant 5.000000e-01 : f32
    %142 = vector.broadcast %cst_46 : f32 to vector<1x512xf32>
    %143 = arith.cmpf ole, %68, %142 : vector<1x512xf32>
    %144 = arith.extui %143 : vector<1x512xi1> to vector<1x512xi32>
    %145 = arith.sitofp %144 : vector<1x512xi32> to vector<1x512xf32>
    %146 = vector.broadcast %145 : vector<1x512xf32> to vector<16x512xf32>
    %147 = arith.mulf %141, %146 : vector<16x512xf32>
    %148 = arith.addf %65, %147 : vector<16x512xf32>
    %149 = vector.extract_strided_slice %65 {offsets = [3, 0], sizes = [1, 512], strides = [1, 1]} : vector<16x512xf32> to vector<1x512xf32>
    %150 = vector.extract_strided_slice %148 {offsets = [3, 0], sizes = [1, 512], strides = [1, 1]} : vector<16x512xf32> to vector<1x512xf32>
    %151 = tpu.concatenate %149, %150 in 0 : vector<1x512xf32>, vector<1x512xf32> -> vector<2x512xf32>
    %c17_i32_47 = arith.constant 17 : i32
    %152 = tpu.dynamic_rotate %151 by %c17_i32_47 dim 1 : vector<2x512xf32>, i32 -> vector<2x512xf32>
    %153 = vector.broadcast %43 : vector<1x512xf32> to vector<2x512xf32>
    %154 = arith.mulf %152, %153 : vector<2x512xf32>
    %155 = arith.maximumf %151, %154 : vector<2x512xf32>
    %c16_i32_48 = arith.constant 16 : i32
    %156 = tpu.dynamic_rotate %151 by %c16_i32_48 dim 1 : vector<2x512xf32>, i32 -> vector<2x512xf32>
    %157 = vector.broadcast %45 : vector<1x512xf32> to vector<2x512xf32>
    %158 = arith.mulf %156, %157 : vector<2x512xf32>
    %159 = arith.maximumf %155, %158 : vector<2x512xf32>
    %c15_i32_49 = arith.constant 15 : i32
    %160 = tpu.dynamic_rotate %151 by %c15_i32_49 dim 1 : vector<2x512xf32>, i32 -> vector<2x512xf32>
    %161 = vector.broadcast %48 : vector<1x512xf32> to vector<2x512xf32>
    %162 = arith.mulf %160, %161 : vector<2x512xf32>
    %163 = arith.maximumf %159, %162 : vector<2x512xf32>
    %c1_i32_50 = arith.constant 1 : i32
    %164 = tpu.dynamic_rotate %151 by %c1_i32_50 dim 1 : vector<2x512xf32>, i32 -> vector<2x512xf32>
    %165 = vector.broadcast %50 : vector<1x512xf32> to vector<2x512xf32>
    %166 = arith.mulf %164, %165 : vector<2x512xf32>
    %167 = arith.maximumf %163, %166 : vector<2x512xf32>
    %c511_i32_51 = arith.constant 511 : i32
    %168 = tpu.dynamic_rotate %151 by %c511_i32_51 dim 1 : vector<2x512xf32>, i32 -> vector<2x512xf32>
    %169 = vector.broadcast %52 : vector<1x512xf32> to vector<2x512xf32>
    %170 = arith.mulf %168, %169 : vector<2x512xf32>
    %171 = arith.maximumf %167, %170 : vector<2x512xf32>
    %c497_i32_52 = arith.constant 497 : i32
    %172 = tpu.dynamic_rotate %151 by %c497_i32_52 dim 1 : vector<2x512xf32>, i32 -> vector<2x512xf32>
    %173 = vector.broadcast %55 : vector<1x512xf32> to vector<2x512xf32>
    %174 = arith.mulf %172, %173 : vector<2x512xf32>
    %175 = arith.maximumf %171, %174 : vector<2x512xf32>
    %c496_i32_53 = arith.constant 496 : i32
    %176 = tpu.dynamic_rotate %151 by %c496_i32_53 dim 1 : vector<2x512xf32>, i32 -> vector<2x512xf32>
    %177 = vector.broadcast %57 : vector<1x512xf32> to vector<2x512xf32>
    %178 = arith.mulf %176, %177 : vector<2x512xf32>
    %179 = arith.maximumf %175, %178 : vector<2x512xf32>
    %c495_i32_54 = arith.constant 495 : i32
    %180 = tpu.dynamic_rotate %151 by %c495_i32_54 dim 1 : vector<2x512xf32>, i32 -> vector<2x512xf32>
    %181 = vector.broadcast %60 : vector<1x512xf32> to vector<2x512xf32>
    %182 = arith.mulf %180, %181 : vector<2x512xf32>
    %183 = arith.maximumf %179, %182 : vector<2x512xf32>
    %184 = vector.extract_strided_slice %183 {offsets = [0, 0], sizes = [1, 512], strides = [1, 1]} : vector<2x512xf32> to vector<1x512xf32>
    %cst_55 = arith.constant 1.000000e-01 : f32
    %185 = vector.broadcast %cst_55 : f32 to vector<1x512xf32>
    %186 = arith.cmpf ogt, %184, %185 : vector<1x512xf32>
    %187 = vector.extract_strided_slice %183 {offsets = [1, 0], sizes = [1, 512], strides = [1, 1]} : vector<2x512xf32> to vector<1x512xf32>
    %cst_56 = arith.constant 1.000000e-01 : f32
    %188 = vector.broadcast %cst_56 : f32 to vector<1x512xf32>
    %189 = arith.cmpf ogt, %187, %188 : vector<1x512xf32>
    %190 = arith.andi %186, %189 : vector<1x512xi1>
    %191 = arith.extui %190 : vector<1x512xi1> to vector<1x512xi32>
    %192 = arith.sitofp %191 : vector<1x512xi32> to vector<1x512xf32>
    %193 = vector.broadcast %192 : vector<1x512xf32> to vector<16x512xf32>
    %194 = arith.mulf %148, %193 : vector<16x512xf32>
    %c0_57 = arith.constant 0 : index
    %c0_58 = arith.constant 0 : index
    %195 = vector.load %arg8[%c0_57, %c0_58] : memref<16x512xf32, #tpu.memory_space<vmem>>, vector<16x512xf32>
    tpu.vector_store %arg8[%c0_57, %c0_58], %194 {strides = array<i32>} : memref<16x512xf32, #tpu.memory_space<vmem>>, vector<16x512xf32>,
    %c1_i32_59 = arith.constant 1 : i32
    %c0_60 = arith.constant 0 : index
    %c0_61 = arith.constant 0 : index
    %196 = vector.load %arg8[%c0_60, %c0_61] : memref<16x512xf32, #tpu.memory_space<vmem>>, vector<16x512xf32>
    %c0_62 = arith.constant 0 : index
    %c0_63 = arith.constant 0 : index
    %197 = vector.load %arg7[%c0_62, %c0_63] : memref<16x512xf32, #tpu.memory_space<vmem>>, vector<16x512xf32>
    tpu.vector_store %arg7[%c0_62, %c0_63], %196 {strides = array<i32>} : memref<16x512xf32, #tpu.memory_space<vmem>>, vector<16x512xf32>,
    return
  }
  func.func @transform_0(%arg0: i32) -> (i32, i32) {
    %c0_i32 = arith.constant 0 : i32
    %c0_i32_0 = arith.constant 0 : i32
    return %c0_i32, %arg0 : i32, i32
  }
  func.func @transform_1(%arg0: i32) -> (i32, i32, i32) {
    %c0_i32 = arith.constant 0 : i32
    %c0_i32_0 = arith.constant 0 : i32
    %c0_i32_1 = arith.constant 0 : i32
    return %c0_i32, %c0_i32_0, %arg0 : i32, i32, i32
  }
  func.func @transform_2(%arg0: i32) -> (i32, i32) {
    %c0_i32 = arith.constant 0 : i32
    %c0_i32_0 = arith.constant 0 : i32
    %c0_i32_1 = arith.constant 0 : i32
    return %c0_i32, %c0_i32_0 : i32, i32
  }
  func.func @transform_3(%arg0: i32) -> (i32, i32) {
    %c0_i32 = arith.constant 0 : i32
    %c0_i32_0 = arith.constant 0 : i32
    %c0_i32_1 = arith.constant 0 : i32
    return %c0_i32, %c0_i32_0 : i32, i32
  }
  func.func @transform_4(%arg0: i32) -> (i32, i32) {
    %c0_i32 = arith.constant 0 : i32
    %c0_i32_0 = arith.constant 0 : i32
    %c0_i32_1 = arith.constant 0 : i32
    return %c0_i32, %c0_i32_0 : i32, i32
  }
  func.func @transform_5(%arg0: i32) -> (i32, i32) {
    %c0_i32 = arith.constant 0 : i32
    %c0_i32_0 = arith.constant 0 : i32
    %c0_i32_1 = arith.constant 0 : i32
    return %c0_i32, %c0_i32_0 : i32, i32
  }
  func.func @transform_6(%arg0: i32) -> (i32, i32) {
    %c0_i32 = arith.constant 0 : i32
    %c0_i32_0 = arith.constant 0 : i32
    return %c0_i32, %arg0 : i32, i32
  }
}

</mosaic_0001>

<llo_original>
// kernel: tpu_custom_call.1
$region0: #{tpu_custom_call.1}
  #allocation0 [shape = 'u32[]', space=smem, size = 0x4, offset = 0x4, fixed_abs, tag = 'smem constant byte address 0x4 - core index']
  #allocation1 [shape = 'u32[144,128]{1,0:T(1,128)}', space=vmem, size = 0x12000, scoped, tag = 'internal scratch']
  #allocation2 [shape = 'f32[16,512]{1,0:T(8,128)}', space=vmem, size = 0x8000, scoped, tag = 'scratch operand']
  %s0 = inlined_call_operand.hbm [shape: f32[16,512], index: 0, kind: input, shape index: {}]
  %s1 = inlined_call_operand.vmem [shape: f32[1,1,512], index: 1, kind: input, shape index: {}]
  %s2 = inlined_call_operand.vmem [shape: f32[32,48], index: 2, kind: input, shape index: {}]
  %s3 = inlined_call_operand.vmem [shape: f32[32,1], index: 3, kind: input, shape index: {}]
  %s4 = inlined_call_operand.vmem [shape: f32[16,32], index: 4, kind: input, shape index: {}]
  %s5 = inlined_call_operand.vmem [shape: f32[16,1], index: 5, kind: input, shape index: {}]
  %s6 = inlined_call_operand.hbm [shape: f32[16,512], index: 6, kind: output, shape index: {}]
  %s7 = sld [smem:[#allocation0]]
  $region38: #{tpu_custom_call.1} parent=0
    _
  %s9 = ssub.s32 1, %s7
  %s10 = scalar_select 0, %s9, %s7
  $region1: #{tpu_custom_call.1} parent=0
    #allocation3 [shape = 'u8[32768]{0}', space=vmem, size = 0x8000, scoped, tag = 'input window, operand 0, single buffered']
    #allocation4 [shape = 's32[1]{0}', space=sflag, size = 0x4, scoped, tag = 'scoped memory for tpu_custom_call.1']
    #allocation5 [shape = 's32[1]{0}', space=sflag, size = 0x4, scoped, tag = 'scoped memory for tpu_custom_call.1']
    #allocation6 [shape = 'u8[32768]{0}', space=vmem, size = 0x8000, scoped, tag = 'output window, operand 0, single buffered']
    %11 = vsyncpa [#allocation4], 0
    %12 = vsyncpa [#allocation5], 0
    // Predicated region
    $region2: #{tpu_custom_call.1} parent=1 // pred_check
      _
    $region3: #{tpu_custom_call.1} parent=1 // pred_check_branch
      %14 = sbr.rel (0) target = $region5
    $region4: #{tpu_custom_call.1} parent=1 // pred_region
      %s16 = ssub.s32 1024, 1024
      %17 = vsyncadd [#allocation4], %s16
      %s18 = sshll.u32 [#allocation3], 4
      %s19 = int_to_ptr.vmem [resolvable:$true] %s18
      %24 = dma.hbm_to_vmem [thread:$0]  %s0, 1024, %s19, [#allocation4], 512, 512, 32
    $region5: #{tpu_custom_call.1} parent=1 // pred_fallthru
      _
    // Predicated region
    $region6: #{tpu_custom_call.1} parent=1 // pred_check
      _
    $region7: #{tpu_custom_call.1} parent=1 // pred_check_branch
      %26 = sbr.rel (0) target = $region9
    $region8: #{tpu_custom_call.1} parent=1 // pred_region
      _
    $region9: #{tpu_custom_call.1} parent=1 // pred_fallthru
      _
    // Predicated region
    $region10: #{tpu_custom_call.1} parent=1 // pred_check
      _
    $region11: #{tpu_custom_call.1} parent=1 // pred_check_branch
      %28 = sbr.rel (0) target = $region13
    $region12: #{tpu_custom_call.1} parent=1 // pred_region
      _
    $region13: #{tpu_custom_call.1} parent=1 // pred_fallthru
      _
    // Predicated region
    $region14: #{tpu_custom_call.1} parent=1 // pred_check
      _
    $region15: #{tpu_custom_call.1} parent=1 // pred_check_branch
      %30 = sbr.rel (0) target = $region17
    $region16: #{tpu_custom_call.1} parent=1 // pred_region
      _
    $region17: #{tpu_custom_call.1} parent=1 // pred_fallthru
      _
    // Predicated region
    $region18: #{tpu_custom_call.1} parent=1 // pred_check
      _
    $region19: #{tpu_custom_call.1} parent=1 // pred_check_branch
      %32 = sbr.rel (0) target = $region21
    $region20: #{tpu_custom_call.1} parent=1 // pred_region
      _
    $region21: #{tpu_custom_call.1} parent=1 // pred_fallthru
      _
    // Predicated region
    $region22: #{tpu_custom_call.1} parent=1 // pred_check
      _
    $region23: #{tpu_custom_call.1} parent=1 // pred_check_branch
      %34 = sbr.rel (0) target = $region25
    $region24: #{tpu_custom_call.1} parent=1 // pred_region
      _
    $region25: #{tpu_custom_call.1} parent=1 // pred_fallthru
      _
    // Predicated region
    $region26: #{tpu_custom_call.1} parent=1 // pred_check
      _
    $region27: #{tpu_custom_call.1} parent=1 // pred_check_branch
      %36 = sbr.rel (0) target = $region29
    $region28: #{tpu_custom_call.1} parent=1 // pred_region
      %37 = dma.done [#allocation4], 1024
    $region29: #{tpu_custom_call.1} parent=1 // pred_fallthru
      _
    %v38 = vlaneseq
    %v39 = vand.u32 %v38, 127
    %v40 = vadd.s32 %v39, 128
    %v41 = vadd.s32 %v39, 256
    %v42 = vadd.s32 %v39, 384
    %vm43 = vcmp.lt.s32.totalorder %v39, 0
    %v44 = vsub.s32 0, %v39
    %v45 = vsel %vm43, %v44, %v39
    %v46 = vshrl.u32 %v45, 8
    %v47 = vand.u32 %v45, 255
    %v48 = vsub.s32 0, %v47
    %v49 = vsel %vm43, %v48, %v47
    %vm50 = vcmp.lt.s32.totalorder %v40, 0
    %v51 = vsub.s32 0, %v40
    %v52 = vsel %vm50, %v51, %v40
    %v53 = vshrl.u32 %v52, 8
    %v54 = vand.u32 %v52, 255
    %v55 = vsub.s32 0, %v54
    %v56 = vsel %vm50, %v55, %v54
    %vm57 = vcmp.lt.s32.totalorder %v41, 0
    %v58 = vsub.s32 0, %v41
    %v59 = vsel %vm57, %v58, %v41
    %v60 = vshrl.u32 %v59, 8
    %v61 = vand.u32 %v59, 255
    %v62 = vsub.s32 0, %v61
    %v63 = vsel %vm57, %v62, %v61
    %vm64 = vcmp.lt.s32.totalorder %v42, 0
    %v65 = vsub.s32 0, %v42
    %v66 = vsel %vm64, %v65, %v42
    %v67 = vshrl.u32 %v66, 8
    %v68 = vand.u32 %v66, 255
    %v69 = vsub.s32 0, %v68
    %v70 = vsel %vm64, %v69, %v68
    %vm71 = vcmp.ne.s32.totalorder %v49, 0
    %vm72 = vcmp.ne.s32.totalorder %v56, 0
    %vm73 = vcmp.ne.s32.totalorder %v63, 0
    %vm74 = vcmp.ne.s32.totalorder %v70, 0
    %vm75 = vcmp.lt.s32.totalorder %v49, 0
    %vm76 = vcmp.lt.s32.totalorder %v56, 0
    %vm77 = vcmp.lt.s32.totalorder %v63, 0
    %vm78 = vcmp.lt.s32.totalorder %v70, 0
    %vm79 = vmand %vm75, %vm71
    %vm80 = vmand %vm76, %vm72
    %vm81 = vmand %vm77, %vm73
    %vm82 = vmand %vm78, %vm74
    %v83 = vadd.s32 %v49, 256
    %v84 = vadd.s32 %v56, 256
    %v85 = vadd.s32 %v63, 256
    %v86 = vadd.s32 %v70, 256
    %v87 = vsel %vm79, %v83, %v49
    %v88 = vsel %vm80, %v84, %v56
    %v89 = vsel %vm81, %v85, %v63
    %v90 = vsel %vm82, %v86, %v70
    %vm91 = vcmp.lt.s32.totalorder %v87, 0
    %v92 = vsub.s32 0, %v87
    %v93 = vsel %vm91, %v92, %v87
    %v94 = vshrl.u32 %v93, 4
    %v95 = vand.u32 %v93, 15
    %v96 = vsub.s32 0, %v95
    %v97 = vsel %vm91, %v96, %v95
    %vm98 = vcmp.lt.s32.totalorder %v88, 0
    %v99 = vsub.s32 0, %v88
    %v100 = vsel %vm98, %v99, %v88
    %v101 = vshrl.u32 %v100, 4
    %v102 = vand.u32 %v100, 15
    %v103 = vsub.s32 0, %v102
    %v104 = vsel %vm98, %v103, %v102
    %vm105 = vcmp.lt.s32.totalorder %v89, 0
    %v106 = vsub.s32 0, %v89
    %v107 = vsel %vm105, %v106, %v89
    %v108 = vshrl.u32 %v107, 4
    %v109 = vand.u32 %v107, 15
    %v110 = vsub.s32 0, %v109
    %v111 = vsel %vm105, %v110, %v109
    %vm112 = vcmp.lt.s32.totalorder %v90, 0
    %v113 = vsub.s32 0, %v90
    %v114 = vsel %vm112, %v113, %v90
    %v115 = vshrl.u32 %v114, 4
    %v116 = vand.u32 %v114, 15
    %v117 = vsub.s32 0, %v116
    %v118 = vsel %vm112, %v117, %v116
    %vm119 = vcmp.ne.s32.totalorder %v97, 0
    %vm120 = vcmp.ne.s32.totalorder %v104, 0
    %vm121 = vcmp.ne.s32.totalorder %v111, 0
    %vm122 = vcmp.ne.s32.totalorder %v118, 0
    %vm123 = vcmp.lt.s32.totalorder %v97, 0
    %vm124 = vcmp.lt.s32.totalorder %v104, 0
    %vm125 = vcmp.lt.s32.totalorder %v111, 0
    %vm126 = vcmp.lt.s32.totalorder %v118, 0
    %vm127 = vmand %vm123, %vm119
    %vm128 = vmand %vm124, %vm120
    %vm129 = vmand %vm125, %vm121
    %vm130 = vmand %vm126, %vm122
    %v131 = vadd.s32 %v97, 16
    %v132 = vadd.s32 %v104, 16
    %v133 = vadd.s32 %v111, 16
    %v134 = vadd.s32 %v118, 16
    %v135 = vsel %vm127, %v131, %v97
    %v136 = vsel %vm128, %v132, %v104
    %v137 = vsel %vm129, %v133, %v111
    %v138 = vsel %vm130, %v134, %v118
    %vm139 = vcmp.ge.s32.totalorder %v87, 16
    %vm140 = vcmp.ge.s32.totalorder %v88, 16
    %vm141 = vcmp.ge.s32.totalorder %v89, 16
    %vm142 = vcmp.ge.s32.totalorder %v90, 16
    %vm143 = vcmp.lt.s32.totalorder %v87, 240
    %vm144 = vcmp.lt.s32.totalorder %v88, 240
    %vm145 = vcmp.lt.s32.totalorder %v89, 240
    %vm146 = vcmp.lt.s32.totalorder %v90, 240
    %vm147 = vcmp.gt.s32.totalorder %v135, 0
    %vm148 = vcmp.gt.s32.totalorder %v136, 0
    %vm149 = vcmp.gt.s32.totalorder %v137, 0
    %vm150 = vcmp.gt.s32.totalorder %v138, 0
    %vm151 = vcmp.lt.s32.totalorder %v135, 15
    %vm152 = vcmp.lt.s32.totalorder %v136, 15
    %vm153 = vcmp.lt.s32.totalorder %v137, 15
    %vm154 = vcmp.lt.s32.totalorder %v138, 15
    %vm155 = vmand %vm139, %vm147
    %vm156 = vmand %vm140, %vm148
    %vm157 = vmand %vm141, %vm149
    %vm158 = vmand %vm142, %vm150
    %v159 = vsel %vm155, 1, 0
    %v160 = vsel %vm156, 1, 0
    %v161 = vsel %vm157, 1, 0
    %v162 = vsel %vm158, 1, 0
    %v163 = vcvt.s32.f32 %v159
    %v164 = vcvt.s32.f32 %v160
    %v165 = vcvt.s32.f32 %v161
    %v166 = vcvt.s32.f32 %v162
    %v167 = vsel %vm139, 1, 0
    %v168 = vsel %vm140, 1, 0
    %v169 = vsel %vm141, 1, 0
    %v170 = vsel %vm142, 1, 0
    %v171 = vcvt.s32.f32 %v167
    %v172 = vcvt.s32.f32 %v168
    %v173 = vcvt.s32.f32 %v169
    %v174 = vcvt.s32.f32 %v170
    %vm175 = vmand %vm139, %vm151
    %vm176 = vmand %vm140, %vm152
    %vm177 = vmand %vm141, %vm153
    %vm178 = vmand %vm142, %vm154
    %v179 = vsel %vm175, 1, 0
    %v180 = vsel %vm176, 1, 0
    %v181 = vsel %vm177, 1, 0
    %v182 = vsel %vm178, 1, 0
    %v183 = vcvt.s32.f32 %v179
    %v184 = vcvt.s32.f32 %v180
    %v185 = vcvt.s32.f32 %v181
    %v186 = vcvt.s32.f32 %v182
    %v187 = vsel %vm147, 1, 0
    %v188 = vsel %vm148, 1, 0
    %v189 = vsel %vm149, 1, 0
    %v190 = vsel %vm150, 1, 0
    %v191 = vcvt.s32.f32 %v187
    %v192 = vcvt.s32.f32 %v188
    %v193 = vcvt.s32.f32 %v189
    %v194 = vcvt.s32.f32 %v190
    %v195 = vsel %vm151, 1, 0
    %v196 = vsel %vm152, 1, 0
    %v197 = vsel %vm153, 1, 0
    %v198 = vsel %vm154, 1, 0
    %v199 = vcvt.s32.f32 %v195
    %v200 = vcvt.s32.f32 %v196
    %v201 = vcvt.s32.f32 %v197
    %v202 = vcvt.s32.f32 %v198
    %vm203 = vmand %vm143, %vm147
    %vm204 = vmand %vm144, %vm148
    %vm205 = vmand %vm145, %vm149
    %vm206 = vmand %vm146, %vm150
    %v207 = vsel %vm203, 1, 0
    %v208 = vsel %vm204, 1, 0
    %v209 = vsel %vm205, 1, 0
    %v210 = vsel %vm206, 1, 0
    %v211 = vcvt.s32.f32 %v207
    %v212 = vcvt.s32.f32 %v208
    %v213 = vcvt.s32.f32 %v209
    %v214 = vcvt.s32.f32 %v210
    %v215 = vsel %vm143, 1, 0
    %v216 = vsel %vm144, 1, 0
    %v217 = vsel %vm145, 1, 0
    %v218 = vsel %vm146, 1, 0
    %v219 = vcvt.s32.f32 %v215
    %v220 = vcvt.s32.f32 %v216
    %v221 = vcvt.s32.f32 %v217
    %v222 = vcvt.s32.f32 %v218
    %vm223 = vmand %vm143, %vm151
    %vm224 = vmand %vm144, %vm152
    %vm225 = vmand %vm145, %vm153
    %vm226 = vmand %vm146, %vm154
    %v227 = vsel %vm223, 1, 0
    %v228 = vsel %vm224, 1, 0
    %v229 = vsel %vm225, 1, 0
    %v230 = vsel %vm226, 1, 0
    %v231 = vcvt.s32.f32 %v227
    %v232 = vcvt.s32.f32 %v228
    %v233 = vcvt.s32.f32 %v229
    %v234 = vcvt.s32.f32 %v230
    %v235 = vld [vmem:[#allocation3] sm:$0xff]
    %v236 = vld [vmem:[#allocation3 + $0x8] sm:$0xff]
    %v237 = vld [vmem:[#allocation3 + $0x10] sm:$0xff]
    %v238 = vld [vmem:[#allocation3 + $0x18] sm:$0xff]
    %v239 = vld [vmem:[#allocation3 + $0x20] sm:$0xff]
    %v240 = vld [vmem:[#allocation3 + $0x28] sm:$0xff]
    %v241 = vld [vmem:[#allocation3 + $0x30] sm:$0xff]
    %v242 = vld [vmem:[#allocation3 + $0x38] sm:$0xff]
    %243 = vst [vmem:[#allocation2] sm:$0xff] %v235
    %244 = vst [vmem:[#allocation2 + $0x8] sm:$0xff] %v236
    %245 = vst [vmem:[#allocation2 + $0x10] sm:$0xff] %v237
    %246 = vst [vmem:[#allocation2 + $0x18] sm:$0xff] %v238
    %247 = vst [vmem:[#allocation2 + $0x20] sm:$0xff] %v239
    %248 = vst [vmem:[#allocation2 + $0x28] sm:$0xff] %v240
    %249 = vst [vmem:[#allocation2 + $0x30] sm:$0xff] %v241
    %250 = vst [vmem:[#allocation2 + $0x38] sm:$0xff] %v242
    %v251 = vld [vmem:[#allocation2] sm:$0xff]
    %v252 = vld [vmem:[#allocation2 + $0x8] sm:$0xff]
    %v253 = vld [vmem:[#allocation2 + $0x10] sm:$0xff]
    %v254 = vld [vmem:[#allocation2 + $0x18] sm:$0xff]
    %v255 = vld [vmem:[#allocation2 + $0x20] sm:$0xff]
    %v256 = vld [vmem:[#allocation2 + $0x28] sm:$0xff]
    %v257 = vld [vmem:[#allocation2 + $0x30] sm:$0xff]
    %v258 = vld [vmem:[#allocation2 + $0x38] sm:$0xff]
    %v259 = vld [vmem:[%s1] sm:$0xf]
    %260 = vrot.lane.b32.xlu0 %v251, 17
    %v261 = vpop.permute.xlu0 %260
    %262 = vrot.lane.b32.xlu0 %v255, 17
    %v263 = vpop.permute.xlu0 %262
    %264 = vrot.lane.b32.xlu0 %v252, 17
    %v265 = vpop.permute.xlu0 %264
    %266 = vrot.lane.b32.xlu0 %v256, 17
    %v267 = vpop.permute.xlu0 %266
    %268 = vrot.lane.b32.xlu0 %v253, 17
    %v269 = vpop.permute.xlu0 %268
    %270 = vrot.lane.b32.xlu0 %v257, 17
    %v271 = vpop.permute.xlu0 %270
    %272 = vrot.lane.b32.xlu0 %v254, 17
    %v273 = vpop.permute.xlu0 %272
    %274 = vrot.lane.b32.xlu0 %v258, 17
    %v275 = vpop.permute.xlu0 %274
    %vm276 = vcmp.lt.s32.totalorder %v39, 17
    %v277 = vsel %vm276, %v269, %v273
    %v278 = vsel %vm276, %v271, %v275
    %v279 = vsel %vm276, %v265, %v269
    %v280 = vsel %vm276, %v267, %v271
    %v281 = vsel %vm276, %v261, %v265
    %v282 = vsel %vm276, %v263, %v267
    %v283 = vsel %vm276, %v273, %v261
    %v284 = vsel %vm276, %v275, %v263
    %v285 = vmul.f32 %v283, %v163
    %v286 = vmul.f32 %v281, %v164
    %v287 = vmul.f32 %v279, %v165
    %v288 = vmul.f32 %v277, %v166
    %v289 = vmul.f32 %v284, %v163
    %v290 = vmul.f32 %v282, %v164
    %v291 = vmul.f32 %v280, %v165
    %v292 = vmul.f32 %v278, %v166
    %v293 = vmul.f32 %v285, -0.125
    %v294 = vmul.f32 %v286, -0.125
    %v295 = vmul.f32 %v287, -0.125
    %v296 = vmul.f32 %v288, -0.125
    %v297 = vmul.f32 %v289, -0.125
    %v298 = vmul.f32 %v290, -0.125
    %v299 = vmul.f32 %v291, -0.125
    %v300 = vmul.f32 %v292, -0.125
    %301 = vrot.lane.b32.xlu0 %v251, 16
    %v302 = vpop.permute.xlu0 %301
    %303 = vrot.lane.b32.xlu0 %v255, 16
    %v304 = vpop.permute.xlu0 %303
    %305 = vrot.lane.b32.xlu0 %v252, 16
    %v306 = vpop.permute.xlu0 %305
    %307 = vrot.lane.b32.xlu0 %v256, 16
    %v308 = vpop.permute.xlu0 %307
    %309 = vrot.lane.b32.xlu0 %v253, 16
    %v310 = vpop.permute.xlu0 %309
    %311 = vrot.lane.b32.xlu0 %v257, 16
    %v312 = vpop.permute.xlu0 %311
    %313 = vrot.lane.b32.xlu0 %v254, 16
    %v314 = vpop.permute.xlu0 %313
    %315 = vrot.lane.b32.xlu0 %v258, 16
    %v316 = vpop.permute.xlu0 %315
    %vm317 = vcmp.lt.s32.totalorder %v39, 16
    %v318 = vsel %vm317, %v310, %v314
    %v319 = vsel %vm317, %v312, %v316
    %v320 = vsel %vm317, %v306, %v310
    %v321 = vsel %vm317, %v308, %v312
    %v322 = vsel %vm317, %v302, %v306
    %v323 = vsel %vm317, %v304, %v308
    %v324 = vsel %vm317, %v314, %v302
    %v325 = vsel %vm317, %v316, %v304
    %v326 = vmul.f32 %v324, %v171
    %v327 = vmul.f32 %v322, %v172
    %v328 = vmul.f32 %v320, %v173
    %v329 = vmul.f32 %v318, %v174
    %v330 = vmul.f32 %v325, %v171
    %v331 = vmul.f32 %v323, %v172
    %v332 = vmul.f32 %v321, %v173
    %v333 = vmul.f32 %v319, %v174
    %v334 = vmul.f32 %v326, -0.25
    %v335 = vmul.f32 %v327, -0.25
    %v336 = vmul.f32 %v328, -0.25
    %v337 = vmul.f32 %v329, -0.25
    %v338 = vmul.f32 %v330, -0.25
    %v339 = vmul.f32 %v331, -0.25
    %v340 = vmul.f32 %v332, -0.25
    %v341 = vmul.f32 %v333, -0.25
    %v342 = vadd.f32 %v293, %v334
    %v343 = vadd.f32 %v294, %v335
    %v344 = vadd.f32 %v295, %v336
    %v345 = vadd.f32 %v296, %v337
    %v346 = vadd.f32 %v297, %v338
    %v347 = vadd.f32 %v298, %v339
    %v348 = vadd.f32 %v299, %v340
    %v349 = vadd.f32 %v300, %v341
    %350 = vrot.lane.b32.xlu0 %v251, 15
    %v351 = vpop.permute.xlu0 %350
    %352 = vrot.lane.b32.xlu0 %v255, 15
    %v353 = vpop.permute.xlu0 %352
    %354 = vrot.lane.b32.xlu0 %v252, 15
    %v355 = vpop.permute.xlu0 %354
    %356 = vrot.lane.b32.xlu0 %v256, 15
    %v357 = vpop.permute.xlu0 %356
    %358 = vrot.lane.b32.xlu0 %v253, 15
    %v359 = vpop.permute.xlu0 %358
    %360 = vrot.lane.b32.xlu0 %v257, 15
    %v361 = vpop.permute.xlu0 %360
    %362 = vrot.lane.b32.xlu0 %v254, 15
    %v363 = vpop.permute.xlu0 %362
    %364 = vrot.lane.b32.xlu0 %v258, 15
    %v365 = vpop.permute.xlu0 %364
    %vm366 = vcmp.lt.s32.totalorder %v39, 15
    %v367 = vsel %vm366, %v359, %v363
    %v368 = vsel %vm366, %v361, %v365
    %v369 = vsel %vm366, %v355, %v359
    %v370 = vsel %vm366, %v357, %v361
    %v371 = vsel %vm366, %v351, %v355
    %v372 = vsel %vm366, %v353, %v357
    %v373 = vsel %vm366, %v363, %v351
    %v374 = vsel %vm366, %v365, %v353
    %v375 = vmul.f32 %v373, %v183
    %v376 = vmul.f32 %v371, %v184
    %v377 = vmul.f32 %v369, %v185
    %v378 = vmul.f32 %v367, %v186
    %v379 = vmul.f32 %v374, %v183
    %v380 = vmul.f32 %v372, %v184
    %v381 = vmul.f32 %v370, %v185
    %v382 = vmul.f32 %v368, %v186
    %v383 = vmul.f32 %v375, 0.125
    %v384 = vmul.f32 %v376, 0.125
    %v385 = vmul.f32 %v377, 0.125
    %v386 = vmul.f32 %v378, 0.125
    %v387 = vmul.f32 %v379, 0.125
    %v388 = vmul.f32 %v380, 0.125
    %v389 = vmul.f32 %v381, 0.125
    %v390 = vmul.f32 %v382, 0.125
    %v391 = vadd.f32 %v293, %v383
    %v392 = vadd.f32 %v294, %v384
    %v393 = vadd.f32 %v295, %v385
    %v394 = vadd.f32 %v296, %v386
    %v395 = vadd.f32 %v297, %v387
    %v396 = vadd.f32 %v298, %v388
    %v397 = vadd.f32 %v299, %v389
    %v398 = vadd.f32 %v300, %v390
    %v399 = vmul.f32 %v375, -0.125
    %v400 = vmul.f32 %v376, -0.125
    %v401 = vmul.f32 %v377, -0.125
    %v402 = vmul.f32 %v378, -0.125
    %v403 = vmul.f32 %v379, -0.125
    %v404 = vmul.f32 %v380, -0.125
    %v405 = vmul.f32 %v381, -0.125
    %v406 = vmul.f32 %v382, -0.125
    %v407 = vadd.f32 %v342, %v399
    %v408 = vadd.f32 %v343, %v400
    %v409 = vadd.f32 %v344, %v401
    %v410 = vadd.f32 %v345, %v402
    %v411 = vadd.f32 %v346, %v403
    %v412 = vadd.f32 %v347, %v404
    %v413 = vadd.f32 %v348, %v405
    %v414 = vadd.f32 %v349, %v406
    %415 = vrot.lane.b32.xlu0 %v251, 1
    %v416 = vpop.permute.xlu0 %415
    %417 = vrot.lane.b32.xlu0 %v255, 1
    %v418 = vpop.permute.xlu0 %417
    %419 = vrot.lane.b32.xlu0 %v252, 1
    %v420 = vpop.permute.xlu0 %419
    %421 = vrot.lane.b32.xlu0 %v256, 1
    %v422 = vpop.permute.xlu0 %421
    %423 = vrot.lane.b32.xlu0 %v253, 1
    %v424 = vpop.permute.xlu0 %423
    %425 = vrot.lane.b32.xlu0 %v257, 1
    %v426 = vpop.permute.xlu0 %425
    %427 = vrot.lane.b32.xlu0 %v254, 1
    %v428 = vpop.permute.xlu0 %427
    %429 = vrot.lane.b32.xlu0 %v258, 1
    %v430 = vpop.permute.xlu0 %429
    %vm431 = vcmp.lt.s32.totalorder %v39, 1
    %v432 = vsel %vm431, %v424, %v428
    %v433 = vsel %vm431, %v426, %v430
    %v434 = vsel %vm431, %v420, %v424
    %v435 = vsel %vm431, %v422, %v426
    %v436 = vsel %vm431, %v416, %v420
    %v437 = vsel %vm431, %v418, %v422
    %v438 = vsel %vm431, %v428, %v416
    %v439 = vsel %vm431, %v430, %v418
    %v440 = vmul.f32 %v438, %v191
    %v441 = vmul.f32 %v436, %v192
    %v442 = vmul.f32 %v434, %v193
    %v443 = vmul.f32 %v432, %v194
    %v444 = vmul.f32 %v439, %v191
    %v445 = vmul.f32 %v437, %v192
    %v446 = vmul.f32 %v435, %v193
    %v447 = vmul.f32 %v433, %v194
    %v448 = vmul.f32 %v440, -0.25
    %v449 = vmul.f32 %v441, -0.25
    %v450 = vmul.f32 %v442, -0.25
    %v451 = vmul.f32 %v443, -0.25
    %v452 = vmul.f32 %v444, -0.25
    %v453 = vmul.f32 %v445, -0.25
    %v454 = vmul.f32 %v446, -0.25
    %v455 = vmul.f32 %v447, -0.25
    %v456 = vadd.f32 %v391, %v448
    %v457 = vadd.f32 %v392, %v449
    %v458 = vadd.f32 %v393, %v450
    %v459 = vadd.f32 %v394, %v451
    %v460 = vadd.f32 %v395, %v452
    %v461 = vadd.f32 %v396, %v453
    %v462 = vadd.f32 %v397, %v454
    %v463 = vadd.f32 %v398, %v455
    %464 = vrot.lane.b32.xlu0 %v251, 127
    %v465 = vpop.permute.xlu0 %464
    %466 = vrot.lane.b32.xlu0 %v255, 127
    %v467 = vpop.permute.xlu0 %466
    %468 = vrot.lane.b32.xlu0 %v252, 127
    %v469 = vpop.permute.xlu0 %468
    %470 = vrot.lane.b32.xlu0 %v256, 127
    %v471 = vpop.permute.xlu0 %470
    %472 = vrot.lane.b32.xlu0 %v253, 127
    %v473 = vpop.permute.xlu0 %472
    %474 = vrot.lane.b32.xlu0 %v257, 127
    %v475 = vpop.permute.xlu0 %474
    %476 = vrot.lane.b32.xlu0 %v254, 127
    %v477 = vpop.permute.xlu0 %476
    %478 = vrot.lane.b32.xlu0 %v258, 127
    %v479 = vpop.permute.xlu0 %478
    %vm480 = vcmp.lt.s32.totalorder %v39, 127
    %v481 = vsel %vm480, %v473, %v477
    %v482 = vsel %vm480, %v475, %v479
    %v483 = vsel %vm480, %v469, %v473
    %v484 = vsel %vm480, %v471, %v475
    %v485 = vsel %vm480, %v465, %v469
    %v486 = vsel %vm480, %v467, %v471
    %v487 = vsel %vm480, %v477, %v465
    %v488 = vsel %vm480, %v479, %v467
    %v489 = vmul.f32 %v485, %v199
    %v490 = vmul.f32 %v483, %v200
    %v491 = vmul.f32 %v481, %v201
    %v492 = vmul.f32 %v487, %v202
    %v493 = vmul.f32 %v486, %v199
    %v494 = vmul.f32 %v484, %v200
    %v495 = vmul.f32 %v482, %v201
    %v496 = vmul.f32 %v488, %v202
    %v497 = vmul.f32 %v489, 0.25
    %v498 = vmul.f32 %v490, 0.25
    %v499 = vmul.f32 %v491, 0.25
    %v500 = vmul.f32 %v492, 0.25
    %v501 = vmul.f32 %v493, 0.25
    %v502 = vmul.f32 %v494, 0.25
    %v503 = vmul.f32 %v495, 0.25
    %v504 = vmul.f32 %v496, 0.25
    %v505 = vadd.f32 %v456, %v497
    %v506 = vadd.f32 %v457, %v498
    %v507 = vadd.f32 %v458, %v499
    %v508 = vadd.f32 %v459, %v500
    %v509 = vadd.f32 %v460, %v501
    %v510 = vadd.f32 %v461, %v502
    %v511 = vadd.f32 %v462, %v503
    %v512 = vadd.f32 %v463, %v504
    %513 = vrot.lane.b32.xlu0 %v251, 113
    %v514 = vpop.permute.xlu0 %513
    %515 = vrot.lane.b32.xlu0 %v255, 113
    %v516 = vpop.permute.xlu0 %515
    %517 = vrot.lane.b32.xlu0 %v252, 113
    %v518 = vpop.permute.xlu0 %517
    %519 = vrot.lane.b32.xlu0 %v256, 113
    %v520 = vpop.permute.xlu0 %519
    %521 = vrot.lane.b32.xlu0 %v253, 113
    %v522 = vpop.permute.xlu0 %521
    %523 = vrot.lane.b32.xlu0 %v257, 113
    %v524 = vpop.permute.xlu0 %523
    %525 = vrot.lane.b32.xlu0 %v254, 113
    %v526 = vpop.permute.xlu0 %525
    %527 = vrot.lane.b32.xlu0 %v258, 113
    %v528 = vpop.permute.xlu0 %527
    %vm529 = vcmp.lt.s32.totalorder %v39, 113
    %v530 = vsel %vm529, %v522, %v526
    %v531 = vsel %vm529, %v524, %v528
    %v532 = vsel %vm529, %v518, %v522
    %v533 = vsel %vm529, %v520, %v524
    %v534 = vsel %vm529, %v514, %v518
    %v535 = vsel %vm529, %v516, %v520
    %v536 = vsel %vm529, %v526, %v514
    %v537 = vsel %vm529, %v528, %v516
    %v538 = vmul.f32 %v534, %v211
    %v539 = vmul.f32 %v532, %v212
    %v540 = vmul.f32 %v530, %v213
    %v541 = vmul.f32 %v536, %v214
    %v542 = vmul.f32 %v535, %v211
    %v543 = vmul.f32 %v533, %v212
    %v544 = vmul.f32 %v531, %v213
    %v545 = vmul.f32 %v537, %v214
    %v546 = vmul.f32 %v538, -0.125
    %v547 = vmul.f32 %v539, -0.125
    %v548 = vmul.f32 %v540, -0.125
    %v549 = vmul.f32 %v541, -0.125
    %v550 = vmul.f32 %v542, -0.125
    %v551 = vmul.f32 %v543, -0.125
    %v552 = vmul.f32 %v544, -0.125
    %v553 = vmul.f32 %v545, -0.125
    %v554 = vadd.f32 %v505, %v546
    %v555 = vadd.f32 %v506, %v547
    %v556 = vadd.f32 %v507, %v548
    %v557 = vadd.f32 %v508, %v549
    %v558 = vadd.f32 %v509, %v550
    %v559 = vadd.f32 %v510, %v551
    %v560 = vadd.f32 %v511, %v552
    %v561 = vadd.f32 %v512, %v553
    %v562 = vmul.f32 %v538, 0.125
    %v563 = vmul.f32 %v539, 0.125
    %v564 = vmul.f32 %v540, 0.125
    %v565 = vmul.f32 %v541, 0.125
    %v566 = vmul.f32 %v542, 0.125
    %v567 = vmul.f32 %v543, 0.125
    %v568 = vmul.f32 %v544, 0.125
    %v569 = vmul.f32 %v545, 0.125
    %v570 = vadd.f32 %v407, %v562
    %v571 = vadd.f32 %v408, %v563
    %v572 = vadd.f32 %v409, %v564
    %v573 = vadd.f32 %v410, %v565
    %v574 = vadd.f32 %v411, %v566
    %v575 = vadd.f32 %v412, %v567
    %v576 = vadd.f32 %v413, %v568
    %v577 = vadd.f32 %v414, %v569
    %578 = vrot.lane.b32.xlu0 %v251, 112
    %v579 = vpop.permute.xlu0 %578
    %580 = vrot.lane.b32.xlu0 %v255, 112
    %v581 = vpop.permute.xlu0 %580
    %582 = vrot.lane.b32.xlu0 %v252, 112
    %v583 = vpop.permute.xlu0 %582
    %584 = vrot.lane.b32.xlu0 %v256, 112
    %v585 = vpop.permute.xlu0 %584
    %586 = vrot.lane.b32.xlu0 %v253, 112
    %v587 = vpop.permute.xlu0 %586
    %588 = vrot.lane.b32.xlu0 %v257, 112
    %v589 = vpop.permute.xlu0 %588
    %590 = vrot.lane.b32.xlu0 %v254, 112
    %v591 = vpop.permute.xlu0 %590
    %592 = vrot.lane.b32.xlu0 %v258, 112
    %v593 = vpop.permute.xlu0 %592
    %vm594 = vcmp.lt.s32.totalorder %v39, 112
    %v595 = vsel %vm594, %v587, %v591
    %v596 = vsel %vm594, %v589, %v593
    %v597 = vsel %vm594, %v583, %v587
    %v598 = vsel %vm594, %v585, %v589
    %v599 = vsel %vm594, %v579, %v583
    %v600 = vsel %vm594, %v581, %v585
    %v601 = vsel %vm594, %v591, %v579
    %v602 = vsel %vm594, %v593, %v581
    %v603 = vmul.f32 %v599, %v219
    %v604 = vmul.f32 %v597, %v220
    %v605 = vmul.f32 %v595, %v221
    %v606 = vmul.f32 %v601, %v222
    %v607 = vmul.f32 %v600, %v219
    %v608 = vmul.f32 %v598, %v220
    %v609 = vmul.f32 %v596, %v221
    %v610 = vmul.f32 %v602, %v222
    %v611 = vmul.f32 %v603, 0.25
    %v612 = vmul.f32 %v604, 0.25
    %v613 = vmul.f32 %v605, 0.25
    %v614 = vmul.f32 %v606, 0.25
    %v615 = vmul.f32 %v607, 0.25
    %v616 = vmul.f32 %v608, 0.25
    %v617 = vmul.f32 %v609, 0.25
    %v618 = vmul.f32 %v610, 0.25
    %v619 = vadd.f32 %v570, %v611
    %v620 = vadd.f32 %v571, %v612
    %v621 = vadd.f32 %v572, %v613
    %v622 = vadd.f32 %v573, %v614
    %v623 = vadd.f32 %v574, %v615
    %v624 = vadd.f32 %v575, %v616
    %v625 = vadd.f32 %v576, %v617
    %v626 = vadd.f32 %v577, %v618
    %627 = vrot.lane.b32.xlu0 %v251, 111
    %v628 = vpop.permute.xlu0 %627
    %629 = vrot.lane.b32.xlu0 %v255, 111
    %v630 = vpop.permute.xlu0 %629
    %631 = vrot.lane.b32.xlu0 %v252, 111
    %v632 = vpop.permute.xlu0 %631
    %633 = vrot.lane.b32.xlu0 %v256, 111
    %v634 = vpop.permute.xlu0 %633
    %635 = vrot.lane.b32.xlu0 %v253, 111
    %v636 = vpop.permute.xlu0 %635
    %637 = vrot.lane.b32.xlu0 %v257, 111
    %v638 = vpop.permute.xlu0 %637
    %639 = vrot.lane.b32.xlu0 %v254, 111
    %v640 = vpop.permute.xlu0 %639
    %641 = vrot.lane.b32.xlu0 %v258, 111
    %v642 = vpop.permute.xlu0 %641
    %vm643 = vcmp.lt.s32.totalorder %v39, 111
    %v644 = vsel %vm643, %v636, %v640
    %v645 = vsel %vm643, %v638, %v642
    %v646 = vsel %vm643, %v632, %v636
    %v647 = vsel %vm643, %v634, %v638
    %v648 = vsel %vm643, %v628, %v632
    %v649 = vsel %vm643, %v630, %v634
    %v650 = vsel %vm643, %v640, %v628
    %v651 = vsel %vm643, %v642, %v630
    %v652 = vmul.f32 %v648, %v231
    %v653 = vmul.f32 %v646, %v232
    %v654 = vmul.f32 %v644, %v233
    %v655 = vmul.f32 %v650, %v234
    %v656 = vmul.f32 %v649, %v231
    %v657 = vmul.f32 %v647, %v232
    %v658 = vmul.f32 %v645, %v233
    %v659 = vmul.f32 %v651, %v234
    %v660 = vmul.f32 %v652, 0.125
    %v661 = vmul.f32 %v653, 0.125
    %v662 = vmul.f32 %v654, 0.125
    %v663 = vmul.f32 %v655, 0.125
    %v664 = vmul.f32 %v656, 0.125
    %v665 = vmul.f32 %v657, 0.125
    %v666 = vmul.f32 %v658, 0.125
    %v667 = vmul.f32 %v659, 0.125
    %v668 = vadd.f32 %v554, %v660
    %v669 = vadd.f32 %v555, %v661
    %v670 = vadd.f32 %v556, %v662
    %v671 = vadd.f32 %v557, %v663
    %v672 = vadd.f32 %v558, %v664
    %v673 = vadd.f32 %v559, %v665
    %v674 = vadd.f32 %v560, %v666
    %v675 = vadd.f32 %v561, %v667
    %v676 = vadd.f32 %v619, %v660
    %v677 = vadd.f32 %v620, %v661
    %v678 = vadd.f32 %v621, %v662
    %v679 = vadd.f32 %v622, %v663
    %v680 = vadd.f32 %v623, %v664
    %v681 = vadd.f32 %v624, %v665
    %v682 = vadd.f32 %v625, %v666
    %v683 = vadd.f32 %v626, %v667
    %v684 = vld [vmem:[%s2] sm:$0xff]
    %v685 = vld [vmem:[%s2 + $0x8] sm:$0xff]
    %v686 = vld [vmem:[%s2 + $0x10] sm:$0xff]
    %v687 = vld [vmem:[%s2 + $0x18] sm:$0xff]
    %v688 = vld [vmem:[%s3] sm:$0xff]
    %v689 = vld [vmem:[%s3 + $0x8] sm:$0xff]
    %v690 = vld [vmem:[%s3 + $0x10] sm:$0xff]
    %v691 = vld [vmem:[%s3 + $0x18] sm:$0xff]
    %693 = vset.pattern.permute.xlu0 0
    %694 = vperm.xlu0 %693, %v688
    %v695 = vpop.permute.xlu0 %694
    %698 = vset.pattern.permute.xlu0 0
    %699 = vperm.xlu0 %698, %v689
    %v700 = vpop.permute.xlu0 %699
    %703 = vset.pattern.permute.xlu0 0
    %704 = vperm.xlu0 %703, %v690
    %v705 = vpop.permute.xlu0 %704
    %708 = vset.pattern.permute.xlu0 0
    %709 = vperm.xlu0 %708, %v691
    %v710 = vpop.permute.xlu0 %709
    %vm712 = vcmask 392192
    %v714 = vsel %vm712, %v684, 0
    %v717 = vsel %vm712, %v685, 0
    %v720 = vsel %vm712, %v686, 0
    %v723 = vsel %vm712, %v687, 0
    %725 = vmatprep.subr.mxu0 0.0
    %726 = vmatpush1.msra.mxu0 0.0
    %727 = vmatprep.subr.mxu0 0.0
    %728 = vmatpush1.msra.mxu0 0.0
    %729 = vmatprep.subr.mxu0 0.0
    %730 = vmatpush1.msra.mxu0 0.0
    %731 = vmatprep.subr.mxu0 0.0
    %732 = vmatpush1.msra.mxu0 0.0
    %733 = vmatprep.subr.mxu0 0.0
    %734 = vmatpush1.msra.mxu0 0.0
    %735 = vmatprep.subr.mxu0 0.0
    %736 = vmatpush1.msra.mxu0 0.0
    %737 = vmatprep.subr.mxu0 0.0
    %738 = vmatpush1.msra.mxu0 0.0
    %739 = vmatprep.subr.mxu0 0.0
    %740 = vmatpush1.msra.mxu0 0.0
    %741 = vmatprep.subr.mxu0 0.0
    %742 = vmatpush1.msra.mxu0 0.0
    %743 = vmatprep.subr.mxu0 0.0
    %744 = vmatpush1.msra.mxu0 0.0
    %745 = vmatprep.subr.mxu0 %v681
    %746 = vmatpush1.msra.mxu0 %v680
    %747 = vmatprep.subr.mxu0 %v677
    %748 = vmatpush1.msra.mxu0 %v676
    %749 = vmatprep.subr.mxu0 %v673
    %750 = vmatpush1.msra.mxu0 %v672
    %751 = vmatprep.subr.mxu0 %v669
    %752 = vmatpush1.msra.mxu0 %v668
    %753 = vmatprep.subr.mxu0 %v256
    %754 = vmatpush1.msra.mxu0 %v255
    %755 = vmatprep.subr.mxu0 %v252
    %756 = vmatpush1.msra.mxu0 %v251
    %757 = vmatprep.subr.mxu0 0.0
    %758 = vmatpush2.msra.mxu0 0.0
    %759 = vmatprep.subr.mxu0 0.0
    %760 = vmatpush2.msra.mxu0 0.0
    %761 = vmatprep.subr.mxu0 0.0
    %762 = vmatpush2.msra.mxu0 0.0
    %763 = vmatprep.subr.mxu0 0.0
    %764 = vmatpush2.msra.mxu0 0.0
    %765 = vmatprep.subr.mxu0 0.0
    %766 = vmatpush2.msra.mxu0 0.0
    %767 = vmatprep.subr.mxu0 0.0
    %768 = vmatpush2.msra.mxu0 0.0
    %769 = vmatprep.subr.mxu0 0.0
    %770 = vmatpush2.msra.mxu0 0.0
    %771 = vmatprep.subr.mxu0 0.0
    %772 = vmatpush2.msra.mxu0 0.0
    %773 = vmatprep.subr.mxu0 0.0
    %774 = vmatpush2.msra.mxu0 0.0
    %775 = vmatprep.subr.mxu0 0.0
    %776 = vmatpush2.msra.mxu0 0.0
    %777 = vmatprep.subr.mxu0 0.0
    %778 = vmatpush2.msra.mxu0 0.0
    %779 = vmatprep.subr.mxu0 0.0
    %780 = vmatpush2.msra.mxu0 0.0
    %781 = vmatprep.subr.mxu0 0.0
    %782 = vmatpush2.msra.mxu0 0.0
    %783 = vmatprep.subr.mxu0 0.0
    %784 = vmatpush2.msra.mxu0 0.0
    %785 = vmatprep.subr.mxu0 0.0
    %786 = vmatpush2.msra.mxu0 0.0
    %787 = vmatprep.subr.mxu0 0.0
    %788 = vmatpush2.msra.mxu0 0.0
    %789 = vmatprep.mubr.f32.mxu0 0.0
    %790 = vmatmul.mubr.f32.gmra.mxu0 %v714
    %v791 = vpop.f32.mrf.mxu0
    %v792 = vadd.f32 %v695, %v791
    %v793 = vpop.f32.mrf.mxu0
    %v794 = vadd.f32 %v695, %v793
    %795 = vmatprep.mubr.f32.mxu0 0.0
    %796 = vmatmul.mubr.f32.gmra.mxu0 %v717
    %v797 = vpop.f32.mrf.mxu0
    %v798 = vadd.f32 %v700, %v797
    %v799 = vpop.f32.mrf.mxu0
    %v800 = vadd.f32 %v700, %v799
    %801 = vmatprep.mubr.f32.mxu0 0.0
    %802 = vmatmul.mubr.f32.gmra.mxu0 %v720
    %v803 = vpop.f32.mrf.mxu0
    %v804 = vadd.f32 %v705, %v803
    %v805 = vpop.f32.mrf.mxu0
    %v806 = vadd.f32 %v705, %v805
    %807 = vmatprep.mubr.f32.mxu0 0.0
    %808 = vmatmul.mubr.f32.gmra.mxu0 %v723
    %v809 = vpop.f32.mrf.mxu0
    %v810 = vadd.f32 %v710, %v809
    %v811 = vpop.f32.mrf.mxu0
    %v812 = vadd.f32 %v710, %v811
    %813 = vdwg.mxu0
    %814 = vmatprep.subr.mxu0 0.0
    %815 = vmatpush1.msra.mxu0 0.0
    %816 = vmatprep.subr.mxu0 0.0
    %817 = vmatpush1.msra.mxu0 0.0
    %818 = vmatprep.subr.mxu0 0.0
    %819 = vmatpush1.msra.mxu0 0.0
    %820 = vmatprep.subr.mxu0 0.0
    %821 = vmatpush1.msra.mxu0 0.0
    %822 = vmatprep.subr.mxu0 0.0
    %823 = vmatpush1.msra.mxu0 0.0
    %824 = vmatprep.subr.mxu0 0.0
    %825 = vmatpush1.msra.mxu0 0.0
    %826 = vmatprep.subr.mxu0 0.0
    %827 = vmatpush1.msra.mxu0 0.0
    %828 = vmatprep.subr.mxu0 0.0
    %829 = vmatpush1.msra.mxu0 0.0
    %830 = vmatprep.subr.mxu0 0.0
    %831 = vmatpush1.msra.mxu0 0.0
    %832 = vmatprep.subr.mxu0 0.0
    %833 = vmatpush1.msra.mxu0 0.0
    %834 = vmatprep.subr.mxu0 %v683
    %835 = vmatpush1.msra.mxu0 %v682
    %836 = vmatprep.subr.mxu0 %v679
    %837 = vmatpush1.msra.mxu0 %v678
    %838 = vmatprep.subr.mxu0 %v675
    %839 = vmatpush1.msra.mxu0 %v674
    %840 = vmatprep.subr.mxu0 %v671
    %841 = vmatpush1.msra.mxu0 %v670
    %842 = vmatprep.subr.mxu0 %v258
    %843 = vmatpush1.msra.mxu0 %v257
    %844 = vmatprep.subr.mxu0 %v254
    %845 = vmatpush1.msra.mxu0 %v253
    %846 = vmatprep.subr.mxu0 0.0
    %847 = vmatpush2.msra.mxu0 0.0
    %848 = vmatprep.subr.mxu0 0.0
    %849 = vmatpush2.msra.mxu0 0.0
    %850 = vmatprep.subr.mxu0 0.0
    %851 = vmatpush2.msra.mxu0 0.0
    %852 = vmatprep.subr.mxu0 0.0
    %853 = vmatpush2.msra.mxu0 0.0
    %854 = vmatprep.subr.mxu0 0.0
    %855 = vmatpush2.msra.mxu0 0.0
    %856 = vmatprep.subr.mxu0 0.0
    %857 = vmatpush2.msra.mxu0 0.0
    %858 = vmatprep.subr.mxu0 0.0
    %859 = vmatpush2.msra.mxu0 0.0
    %860 = vmatprep.subr.mxu0 0.0
    %861 = vmatpush2.msra.mxu0 0.0
    %862 = vmatprep.subr.mxu0 0.0
    %863 = vmatpush2.msra.mxu0 0.0
    %864 = vmatprep.subr.mxu0 0.0
    %865 = vmatpush2.msra.mxu0 0.0
    %866 = vmatprep.subr.mxu0 0.0
    %867 = vmatpush2.msra.mxu0 0.0
    %868 = vmatprep.subr.mxu0 0.0
    %869 = vmatpush2.msra.mxu0 0.0
    %870 = vmatprep.subr.mxu0 0.0
    %871 = vmatpush2.msra.mxu0 0.0
    %872 = vmatprep.subr.mxu0 0.0
    %873 = vmatpush2.msra.mxu0 0.0
    %874 = vmatprep.subr.mxu0 0.0
    %875 = vmatpush2.msra.mxu0 0.0
    %876 = vmatprep.subr.mxu0 0.0
    %877 = vmatpush2.msra.mxu0 0.0
    %878 = vmatprep.mubr.f32.mxu0 0.0
    %879 = vmatmul.mubr.f32.gmra.mxu0 %v714
    %v880 = vpop.f32.mrf.mxu0
    %v881 = vadd.f32 %v695, %v880
    %v882 = vpop.f32.mrf.mxu0
    %v883 = vadd.f32 %v695, %v882
    %884 = vmatprep.mubr.f32.mxu0 0.0
    %885 = vmatmul.mubr.f32.gmra.mxu0 %v717
    %v886 = vpop.f32.mrf.mxu0
    %v887 = vadd.f32 %v700, %v886
    %v888 = vpop.f32.mrf.mxu0
    %v889 = vadd.f32 %v700, %v888
    %890 = vmatprep.mubr.f32.mxu0 0.0
    %891 = vmatmul.mubr.f32.gmra.mxu0 %v720
    %v892 = vpop.f32.mrf.mxu0
    %v893 = vadd.f32 %v705, %v892
    %v894 = vpop.f32.mrf.mxu0
    %v895 = vadd.f32 %v705, %v894
    %896 = vmatprep.mubr.f32.mxu0 0.0
    %897 = vmatmul.mubr.f32.gmra.mxu0 %v723
    %v898 = vpop.f32.mrf.mxu0
    %v899 = vadd.f32 %v710, %v898
    %v900 = vpop.f32.mrf.mxu0
    %v901 = vadd.f32 %v710, %v900
    %902 = vdwg.mxu0
    %v903 = vmax.f32 %v792, 0.0
    %v904 = vmax.f32 %v794, 0.0
    %v905 = vmax.f32 %v881, 0.0
    %v906 = vmax.f32 %v883, 0.0
    %v907 = vmax.f32 %v798, 0.0
    %v908 = vmax.f32 %v800, 0.0
    %v909 = vmax.f32 %v887, 0.0
    %v910 = vmax.f32 %v889, 0.0
    %v911 = vmax.f32 %v804, 0.0
    %v912 = vmax.f32 %v806, 0.0
    %v913 = vmax.f32 %v893, 0.0
    %v914 = vmax.f32 %v895, 0.0
    %v915 = vmax.f32 %v810, 0.0
    %v916 = vmax.f32 %v812, 0.0
    %v917 = vmax.f32 %v899, 0.0
    %v918 = vmax.f32 %v901, 0.0
    %v919 = vld [vmem:[%s4] sm:$0xff]
    %v920 = vld [vmem:[%s4 + $0x8] sm:$0xff]
    %v921 = vld [vmem:[%s5] sm:$0xff]
    %v922 = vld [vmem:[%s5 + $0x8] sm:$0xff]
    %924 = vset.pattern.permute.xlu0 0
    %925 = vperm.xlu0 %924, %v921
    %v926 = vpop.permute.xlu0 %925
    %929 = vset.pattern.permute.xlu0 0
    %930 = vperm.xlu0 %929, %v922
    %v931 = vpop.permute.xlu0 %930
    %vm933 = vcmask 261120
    %v935 = vsel %vm933, %v919, 0
    %v938 = vsel %vm933, %v920, 0
    %940 = vmatprep.subr.mxu0 0.0
    %941 = vmatpush1.msra.mxu0 0.0
    %942 = vmatprep.subr.mxu0 0.0
    %943 = vmatpush1.msra.mxu0 0.0
    %944 = vmatprep.subr.mxu0 0.0
    %945 = vmatpush1.msra.mxu0 0.0
    %946 = vmatprep.subr.mxu0 0.0
    %947 = vmatpush1.msra.mxu0 0.0
    %948 = vmatprep.subr.mxu0 0.0
    %949 = vmatpush1.msra.mxu0 0.0
    %950 = vmatprep.subr.mxu0 0.0
    %951 = vmatpush1.msra.mxu0 0.0
    %952 = vmatprep.subr.mxu0 0.0
    %953 = vmatpush1.msra.mxu0 0.0
    %954 = vmatprep.subr.mxu0 0.0
    %955 = vmatpush1.msra.mxu0 0.0
    %956 = vmatprep.subr.mxu0 0.0
    %957 = vmatpush1.msra.mxu0 0.0
    %958 = vmatprep.subr.mxu0 0.0
    %959 = vmatpush1.msra.mxu0 0.0
    %960 = vmatprep.subr.mxu0 0.0
    %961 = vmatpush1.msra.mxu0 0.0
    %962 = vmatprep.subr.mxu0 0.0
    %963 = vmatpush1.msra.mxu0 0.0
    %964 = vmatprep.subr.mxu0 %v916
    %965 = vmatpush1.msra.mxu0 %v915
    %966 = vmatprep.subr.mxu0 %v912
    %967 = vmatpush1.msra.mxu0 %v911
    %968 = vmatprep.subr.mxu0 %v908
    %969 = vmatpush1.msra.mxu0 %v907
    %970 = vmatprep.subr.mxu0 %v904
    %971 = vmatpush1.msra.mxu0 %v903
    %972 = vmatprep.subr.mxu0 0.0
    %973 = vmatpush2.msra.mxu0 0.0
    %974 = vmatprep.subr.mxu0 0.0
    %975 = vmatpush2.msra.mxu0 0.0
    %976 = vmatprep.subr.mxu0 0.0
    %977 = vmatpush2.msra.mxu0 0.0
    %978 = vmatprep.subr.mxu0 0.0
    %979 = vmatpush2.msra.mxu0 0.0
    %980 = vmatprep.subr.mxu0 0.0
    %981 = vmatpush2.msra.mxu0 0.0
    %982 = vmatprep.subr.mxu0 0.0
    %983 = vmatpush2.msra.mxu0 0.0
    %984 = vmatprep.subr.mxu0 0.0
    %985 = vmatpush2.msra.mxu0 0.0
    %986 = vmatprep.subr.mxu0 0.0
    %987 = vmatpush2.msra.mxu0 0.0
    %988 = vmatprep.subr.mxu0 0.0
    %989 = vmatpush2.msra.mxu0 0.0
    %990 = vmatprep.subr.mxu0 0.0
    %991 = vmatpush2.msra.mxu0 0.0
    %992 = vmatprep.subr.mxu0 0.0
    %993 = vmatpush2.msra.mxu0 0.0
    %994 = vmatprep.subr.mxu0 0.0
    %995 = vmatpush2.msra.mxu0 0.0
    %996 = vmatprep.subr.mxu0 0.0
    %997 = vmatpush2.msra.mxu0 0.0
    %998 = vmatprep.subr.mxu0 0.0
    %999 = vmatpush2.msra.mxu0 0.0
    %1000 = vmatprep.subr.mxu0 0.0
    %1001 = vmatpush2.msra.mxu0 0.0
    %1002 = vmatprep.subr.mxu0 0.0
    %1003 = vmatpush2.msra.mxu0 0.0
    %1004 = vmatprep.mubr.f32.mxu0 0.0
    %1005 = vmatmul.mubr.f32.gmra.mxu0 %v935
    %v1006 = vpop.f32.mrf.mxu0
    %v1007 = vadd.f32 %v926, %v1006
    %v1008 = vpop.f32.mrf.mxu0
    %v1009 = vadd.f32 %v926, %v1008
    %1010 = vmatprep.mubr.f32.mxu0 0.0
    %1011 = vmatmul.mubr.f32.gmra.mxu0 %v938
    %v1012 = vpop.f32.mrf.mxu0
    %v1013 = vadd.f32 %v931, %v1012
    %v1014 = vpop.f32.mrf.mxu0
    %v1015 = vadd.f32 %v931, %v1014
    %1016 = vdwg.mxu0
    %1017 = vmatprep.subr.mxu0 0.0
    %1018 = vmatpush1.msra.mxu0 0.0
    %1019 = vmatprep.subr.mxu0 0.0
    %1020 = vmatpush1.msra.mxu0 0.0
    %1021 = vmatprep.subr.mxu0 0.0
    %1022 = vmatpush1.msra.mxu0 0.0
    %1023 = vmatprep.subr.mxu0 0.0
    %1024 = vmatpush1.msra.mxu0 0.0
    %1025 = vmatprep.subr.mxu0 0.0
    %1026 = vmatpush1.msra.mxu0 0.0
    %1027 = vmatprep.subr.mxu0 0.0
    %1028 = vmatpush1.msra.mxu0 0.0
    %1029 = vmatprep.subr.mxu0 0.0
    %1030 = vmatpush1.msra.mxu0 0.0
    %1031 = vmatprep.subr.mxu0 0.0
    %1032 = vmatpush1.msra.mxu0 0.0
    %1033 = vmatprep.subr.mxu0 0.0
    %1034 = vmatpush1.msra.mxu0 0.0
    %1035 = vmatprep.subr.mxu0 0.0
    %1036 = vmatpush1.msra.mxu0 0.0
    %1037 = vmatprep.subr.mxu0 0.0
    %1038 = vmatpush1.msra.mxu0 0.0
    %1039 = vmatprep.subr.mxu0 0.0
    %1040 = vmatpush1.msra.mxu0 0.0
    %1041 = vmatprep.subr.mxu0 %v918
    %1042 = vmatpush1.msra.mxu0 %v917
    %1043 = vmatprep.subr.mxu0 %v914
    %1044 = vmatpush1.msra.mxu0 %v913
    %1045 = vmatprep.subr.mxu0 %v910
    %1046 = vmatpush1.msra.mxu0 %v909
    %1047 = vmatprep.subr.mxu0 %v906
    %1048 = vmatpush1.msra.mxu0 %v905
    %1049 = vmatprep.subr.mxu0 0.0
    %1050 = vmatpush2.msra.mxu0 0.0
    %1051 = vmatprep.subr.mxu0 0.0
    %1052 = vmatpush2.msra.mxu0 0.0
    %1053 = vmatprep.subr.mxu0 0.0
    %1054 = vmatpush2.msra.mxu0 0.0
    %1055 = vmatprep.subr.mxu0 0.0
    %1056 = vmatpush2.msra.mxu0 0.0
    %1057 = vmatprep.subr.mxu0 0.0
    %1058 = vmatpush2.msra.mxu0 0.0
    %1059 = vmatprep.subr.mxu0 0.0
    %1060 = vmatpush2.msra.mxu0 0.0
    %1061 = vmatprep.subr.mxu0 0.0
    %1062 = vmatpush2.msra.mxu0 0.0
    %1063 = vmatprep.subr.mxu0 0.0
    %1064 = vmatpush2.msra.mxu0 0.0
    %1065 = vmatprep.subr.mxu0 0.0
    %1066 = vmatpush2.msra.mxu0 0.0
    %1067 = vmatprep.subr.mxu0 0.0
    %1068 = vmatpush2.msra.mxu0 0.0
    %1069 = vmatprep.subr.mxu0 0.0
    %1070 = vmatpush2.msra.mxu0 0.0
    %1071 = vmatprep.subr.mxu0 0.0
    %1072 = vmatpush2.msra.mxu0 0.0
    %1073 = vmatprep.subr.mxu0 0.0
    %1074 = vmatpush2.msra.mxu0 0.0
    %1075 = vmatprep.subr.mxu0 0.0
    %1076 = vmatpush2.msra.mxu0 0.0
    %1077 = vmatprep.subr.mxu0 0.0
    %1078 = vmatpush2.msra.mxu0 0.0
    %1079 = vmatprep.subr.mxu0 0.0
    %1080 = vmatpush2.msra.mxu0 0.0
    %1081 = vmatprep.mubr.f32.mxu0 0.0
    %1082 = vmatmul.mubr.f32.gmra.mxu0 %v935
    %v1083 = vpop.f32.mrf.mxu0
    %v1084 = vadd.f32 %v926, %v1083
    %v1085 = vpop.f32.mrf.mxu0
    %v1086 = vadd.f32 %v926, %v1085
    %1087 = vmatprep.mubr.f32.mxu0 0.0
    %1088 = vmatmul.mubr.f32.gmra.mxu0 %v938
    %v1089 = vpop.f32.mrf.mxu0
    %v1090 = vadd.f32 %v931, %v1089
    %v1091 = vpop.f32.mrf.mxu0
    %v1092 = vadd.f32 %v931, %v1091
    %1093 = vdwg.mxu0
    %vm1094 = vcmp.le.f32.partialorder %v259, 0.5
    %v1095 = vsel %vm1094, 1, 0
    %v1096 = vcvt.s32.f32 %v1095
    %v1098 = vlaneseq
    %v1099 = vshrl.u32 %v1098, 7
    %v1100 = vsub.s32 0, %v1099
    %v1101 = vrot.slane %v1096, %v1100
    %v1102 = vlaneseq
    %v1103 = vshrl.u32 %v1102, 7
    %v1104 = vsub.s32 1, %v1103
    %v1105 = vrot.slane %v1096, %v1104
    %v1106 = vlaneseq
    %v1107 = vshrl.u32 %v1106, 7
    %v1108 = vsub.s32 2, %v1107
    %v1109 = vrot.slane %v1096, %v1108
    %v1110 = vlaneseq
    %v1111 = vshrl.u32 %v1110, 7
    %v1112 = vsub.s32 3, %v1111
    %v1113 = vrot.slane %v1096, %v1112
    %v1118 = vmul.f32 %v1007, %v1101
    %v1119 = vmul.f32 %v1009, %v1105
    %v1120 = vmul.f32 %v1084, %v1109
    %v1121 = vmul.f32 %v1086, %v1113
    %v1122 = vmul.f32 %v1013, %v1101
    %v1123 = vmul.f32 %v1015, %v1105
    %v1124 = vmul.f32 %v1090, %v1109
    %v1125 = vmul.f32 %v1092, %v1113
    %v1126 = vadd.f32 %v251, %v1118
    %v1127 = vadd.f32 %v252, %v1119
    %v1128 = vadd.f32 %v253, %v1120
    %v1129 = vadd.f32 %v254, %v1121
    %v1130 = vadd.f32 %v255, %v1122
    %v1131 = vadd.f32 %v256, %v1123
    %v1132 = vadd.f32 %v257, %v1124
    %v1133 = vadd.f32 %v258, %v1125
    %v1138 = vrot.slane %v251, 3
    %v1139 = vrot.slane %v252, 3
    %v1140 = vrot.slane %v253, 3
    %v1141 = vrot.slane %v254, 3
    %v1150 = vrot.slane %v1126, 2
    %v1151 = vrot.slane %v1127, 2
    %v1152 = vrot.slane %v1128, 2
    %v1153 = vrot.slane %v1129, 2
    %vm1158 = vcmask 1040384
    %v1159 = vsel %vm1158, %v1138, %v1150
    %v1160 = vsel %vm1158, %v1139, %v1151
    %v1161 = vsel %vm1158, %v1140, %v1152
    %v1162 = vsel %vm1158, %v1141, %v1153
    %1163 = vrot.lane.b32.xlu0 %v1159, 17
    %v1164 = vpop.permute.xlu0 %1163
    %1165 = vrot.lane.b32.xlu0 %v1160, 17
    %v1166 = vpop.permute.xlu0 %1165
    %1167 = vrot.lane.b32.xlu0 %v1161, 17
    %v1168 = vpop.permute.xlu0 %1167
    %1169 = vrot.lane.b32.xlu0 %v1162, 17
    %v1170 = vpop.permute.xlu0 %1169
    %v1171 = vsel %vm276, %v1168, %v1170
    %v1172 = vsel %vm276, %v1166, %v1168
    %v1173 = vsel %vm276, %v1164, %v1166
    %v1174 = vsel %vm276, %v1170, %v1164
    %v1175 = vmul.f32 %v1174, %v163
    %v1176 = vmul.f32 %v1173, %v164
    %v1177 = vmul.f32 %v1172, %v165
    %v1178 = vmul.f32 %v1171, %v166
    %v1179 = vmax.f32 %v1159, %v1175
    %v1180 = vmax.f32 %v1160, %v1176
    %v1181 = vmax.f32 %v1161, %v1177
    %v1182 = vmax.f32 %v1162, %v1178
    %1183 = vrot.lane.b32.xlu0 %v1159, 16
    %v1184 = vpop.permute.xlu0 %1183
    %1185 = vrot.lane.b32.xlu0 %v1160, 16
    %v1186 = vpop.permute.xlu0 %1185
    %1187 = vrot.lane.b32.xlu0 %v1161, 16
    %v1188 = vpop.permute.xlu0 %1187
    %1189 = vrot.lane.b32.xlu0 %v1162, 16
    %v1190 = vpop.permute.xlu0 %1189
    %v1191 = vsel %vm317, %v1188, %v1190
    %v1192 = vsel %vm317, %v1186, %v1188
    %v1193 = vsel %vm317, %v1184, %v1186
    %v1194 = vsel %vm317, %v1190, %v1184
    %v1195 = vmul.f32 %v1194, %v171
    %v1196 = vmul.f32 %v1193, %v172
    %v1197 = vmul.f32 %v1192, %v173
    %v1198 = vmul.f32 %v1191, %v174
    %v1199 = vmax.f32 %v1179, %v1195
    %v1200 = vmax.f32 %v1180, %v1196
    %v1201 = vmax.f32 %v1181, %v1197
    %v1202 = vmax.f32 %v1182, %v1198
    %1203 = vrot.lane.b32.xlu0 %v1159, 15
    %v1204 = vpop.permute.xlu0 %1203
    %1205 = vrot.lane.b32.xlu0 %v1160, 15
    %v1206 = vpop.permute.xlu0 %1205
    %1207 = vrot.lane.b32.xlu0 %v1161, 15
    %v1208 = vpop.permute.xlu0 %1207
    %1209 = vrot.lane.b32.xlu0 %v1162, 15
    %v1210 = vpop.permute.xlu0 %1209
    %v1211 = vsel %vm366, %v1208, %v1210
    %v1212 = vsel %vm366, %v1206, %v1208
    %v1213 = vsel %vm366, %v1204, %v1206
    %v1214 = vsel %vm366, %v1210, %v1204
    %v1215 = vmul.f32 %v1214, %v183
    %v1216 = vmul.f32 %v1213, %v184
    %v1217 = vmul.f32 %v1212, %v185
    %v1218 = vmul.f32 %v1211, %v186
    %v1219 = vmax.f32 %v1199, %v1215
    %v1220 = vmax.f32 %v1200, %v1216
    %v1221 = vmax.f32 %v1201, %v1217
    %v1222 = vmax.f32 %v1202, %v1218
    %1223 = vrot.lane.b32.xlu0 %v1159, 1
    %v1224 = vpop.permute.xlu0 %1223
    %1225 = vrot.lane.b32.xlu0 %v1160, 1
    %v1226 = vpop.permute.xlu0 %1225
    %1227 = vrot.lane.b32.xlu0 %v1161, 1
    %v1228 = vpop.permute.xlu0 %1227
    %1229 = vrot.lane.b32.xlu0 %v1162, 1
    %v1230 = vpop.permute.xlu0 %1229
    %v1231 = vsel %vm431, %v1228, %v1230
    %v1232 = vsel %vm431, %v1226, %v1228
    %v1233 = vsel %vm431, %v1224, %v1226
    %v1234 = vsel %vm431, %v1230, %v1224
    %v1235 = vmul.f32 %v1234, %v191
    %v1236 = vmul.f32 %v1233, %v192
    %v1237 = vmul.f32 %v1232, %v193
    %v1238 = vmul.f32 %v1231, %v194
    %v1239 = vmax.f32 %v1219, %v1235
    %v1240 = vmax.f32 %v1220, %v1236
    %v1241 = vmax.f32 %v1221, %v1237
    %v1242 = vmax.f32 %v1222, %v1238
    %1243 = vrot.lane.b32.xlu0 %v1159, 127
    %v1244 = vpop.permute.xlu0 %1243
    %1245 = vrot.lane.b32.xlu0 %v1160, 127
    %v1246 = vpop.permute.xlu0 %1245
    %1247 = vrot.lane.b32.xlu0 %v1161, 127
    %v1248 = vpop.permute.xlu0 %1247
    %1249 = vrot.lane.b32.xlu0 %v1162, 127
    %v1250 = vpop.permute.xlu0 %1249
    %v1251 = vsel %vm480, %v1248, %v1250
    %v1252 = vsel %vm480, %v1246, %v1248
    %v1253 = vsel %vm480, %v1244, %v1246
    %v1254 = vsel %vm480, %v1250, %v1244
    %v1255 = vmul.f32 %v1253, %v199
    %v1256 = vmul.f32 %v1252, %v200
    %v1257 = vmul.f32 %v1251, %v201
    %v1258 = vmul.f32 %v1254, %v202
    %v1259 = vmax.f32 %v1239, %v1255
    %v1260 = vmax.f32 %v1240, %v1256
    %v1261 = vmax.f32 %v1241, %v1257
    %v1262 = vmax.f32 %v1242, %v1258
    %1263 = vrot.lane.b32.xlu0 %v1159, 113
    %v1264 = vpop.permute.xlu0 %1263
    %1265 = vrot.lane.b32.xlu0 %v1160, 113
    %v1266 = vpop.permute.xlu0 %1265
    %1267 = vrot.lane.b32.xlu0 %v1161, 113
    %v1268 = vpop.permute.xlu0 %1267
    %1269 = vrot.lane.b32.xlu0 %v1162, 113
    %v1270 = vpop.permute.xlu0 %1269
    %v1271 = vsel %vm529, %v1268, %v1270
    %v1272 = vsel %vm529, %v1266, %v1268
    %v1273 = vsel %vm529, %v1264, %v1266
    %v1274 = vsel %vm529, %v1270, %v1264
    %v1275 = vmul.f32 %v1273, %v211
    %v1276 = vmul.f32 %v1272, %v212
    %v1277 = vmul.f32 %v1271, %v213
    %v1278 = vmul.f32 %v1274, %v214
    %v1279 = vmax.f32 %v1259, %v1275
    %v1280 = vmax.f32 %v1260, %v1276
    %v1281 = vmax.f32 %v1261, %v1277
    %v1282 = vmax.f32 %v1262, %v1278
    %1283 = vrot.lane.b32.xlu0 %v1159, 112
    %v1284 = vpop.permute.xlu0 %1283
    %1285 = vrot.lane.b32.xlu0 %v1160, 112
    %v1286 = vpop.permute.xlu0 %1285
    %1287 = vrot.lane.b32.xlu0 %v1161, 112
    %v1288 = vpop.permute.xlu0 %1287
    %1289 = vrot.lane.b32.xlu0 %v1162, 112
    %v1290 = vpop.permute.xlu0 %1289
    %v1291 = vsel %vm594, %v1288, %v1290
    %v1292 = vsel %vm594, %v1286, %v1288
    %v1293 = vsel %vm594, %v1284, %v1286
    %v1294 = vsel %vm594, %v1290, %v1284
    %v1295 = vmul.f32 %v1293, %v219
    %v1296 = vmul.f32 %v1292, %v220
    %v1297 = vmul.f32 %v1291, %v221
    %v1298 = vmul.f32 %v1294, %v222
    %v1299 = vmax.f32 %v1279, %v1295
    %v1300 = vmax.f32 %v1280, %v1296
    %v1301 = vmax.f32 %v1281, %v1297
    %v1302 = vmax.f32 %v1282, %v1298
    %1303 = vrot.lane.b32.xlu0 %v1159, 111
    %v1304 = vpop.permute.xlu0 %1303
    %1305 = vrot.lane.b32.xlu0 %v1160, 111
    %v1306 = vpop.permute.xlu0 %1305
    %1307 = vrot.lane.b32.xlu0 %v1161, 111
    %v1308 = vpop.permute.xlu0 %1307
    %1309 = vrot.lane.b32.xlu0 %v1162, 111
    %v1310 = vpop.permute.xlu0 %1309
    %v1311 = vsel %vm643, %v1308, %v1310
    %v1312 = vsel %vm643, %v1306, %v1308
    %v1313 = vsel %vm643, %v1304, %v1306
    %v1314 = vsel %vm643, %v1310, %v1304
    %v1315 = vmul.f32 %v1313, %v231
    %v1316 = vmul.f32 %v1312, %v232
    %v1317 = vmul.f32 %v1311, %v233
    %v1318 = vmul.f32 %v1314, %v234
    %v1319 = vmax.f32 %v1299, %v1315
    %v1320 = vmax.f32 %v1300, %v1316
    %v1321 = vmax.f32 %v1301, %v1317
    %v1322 = vmax.f32 %v1302, %v1318
    %vm1323 = vcmp.gt.f32.partialorder %v1319, 0.1
    %vm1324 = vcmp.gt.f32.partialorder %v1320, 0.1
    %vm1325 = vcmp.gt.f32.partialorder %v1321, 0.1
    %vm1326 = vcmp.gt.f32.partialorder %v1322, 0.1
    %v1327 = vsel %vm1323, 1, 0
    %v1328 = vsel %vm1324, 1, 0
    %v1329 = vsel %vm1325, 1, 0
    %v1330 = vsel %vm1326, 1, 0
    %v1331 = vrot.slane %v1327, 1
    %v1332 = vrot.slane %v1328, 1
    %v1333 = vrot.slane %v1329, 1
    %v1334 = vrot.slane %v1330, 1
    %vm1335 = vcmp.ne.s32.totalorder %v1331, 0
    %vm1336 = vcmp.ne.s32.totalorder %v1332, 0
    %vm1337 = vcmp.ne.s32.totalorder %v1333, 0
    %vm1338 = vcmp.ne.s32.totalorder %v1334, 0
    %vm1339 = vmand %vm1323, %vm1335
    %vm1340 = vmand %vm1324, %vm1336
    %vm1341 = vmand %vm1325, %vm1337
    %vm1342 = vmand %vm1326, %vm1338
    %v1343 = vsel %vm1339, 1, 0
    %v1344 = vsel %vm1340, 1, 0
    %v1345 = vsel %vm1341, 1, 0
    %v1346 = vsel %vm1342, 1, 0
    %v1347 = vcvt.s32.f32 %v1343
    %v1348 = vcvt.s32.f32 %v1344
    %v1349 = vcvt.s32.f32 %v1345
    %v1350 = vcvt.s32.f32 %v1346
    %v1351 = vlaneseq
    %v1352 = vshrl.u32 %v1351, 7
    %v1353 = vsub.s32 0, %v1352
    %v1354 = vrot.slane %v1347, %v1353
    %v1355 = vlaneseq
    %v1356 = vshrl.u32 %v1355, 7
    %v1357 = vsub.s32 0, %v1356
    %v1358 = vrot.slane %v1348, %v1357
    %v1359 = vlaneseq
    %v1360 = vshrl.u32 %v1359, 7
    %v1361 = vsub.s32 0, %v1360
    %v1362 = vrot.slane %v1349, %v1361
    %v1363 = vlaneseq
    %v1364 = vshrl.u32 %v1363, 7
    %v1365 = vsub.s32 0, %v1364
    %v1366 = vrot.slane %v1350, %v1365
    %v1367 = vmul.f32 %v1126, %v1354
    %v1368 = vmul.f32 %v1127, %v1358
    %v1369 = vmul.f32 %v1128, %v1362
    %v1370 = vmul.f32 %v1129, %v1366
    %v1371 = vmul.f32 %v1130, %v1354
    %v1372 = vmul.f32 %v1131, %v1358
    %v1373 = vmul.f32 %v1132, %v1362
    %v1374 = vmul.f32 %v1133, %v1366
    %1375 = vst [vmem:[#allocation2] sm:$0xff] %v1367
    %1376 = vst [vmem:[#allocation2 + $0x8] sm:$0xff] %v1368
    %1377 = vst [vmem:[#allocation2 + $0x10] sm:$0xff] %v1369
    %1378 = vst [vmem:[#allocation2 + $0x18] sm:$0xff] %v1370
    %1379 = vst [vmem:[#allocation2 + $0x20] sm:$0xff] %v1371
    %1380 = vst [vmem:[#allocation2 + $0x28] sm:$0xff] %v1372
    %1381 = vst [vmem:[#allocation2 + $0x30] sm:$0xff] %v1373
    %1382 = vst [vmem:[#allocation2 + $0x38] sm:$0xff] %v1374
    %v1383 = vld [vmem:[#allocation2] sm:$0xff]
    %v1384 = vld [vmem:[#allocation2 + $0x8] sm:$0xff]
    %v1385 = vld [vmem:[#allocation2 + $0x10] sm:$0xff]
    %v1386 = vld [vmem:[#allocation2 + $0x18] sm:$0xff]
    %v1387 = vld [vmem:[#allocation2 + $0x20] sm:$0xff]
    %v1388 = vld [vmem:[#allocation2 + $0x28] sm:$0xff]
    %v1389 = vld [vmem:[#allocation2 + $0x30] sm:$0xff]
    %v1390 = vld [vmem:[#allocation2 + $0x38] sm:$0xff]
    %1391 = vst [vmem:[#allocation6] sm:$0xff] %v1383
    %1392 = vst [vmem:[#allocation6 + $0x8] sm:$0xff] %v1384
    %1393 = vst [vmem:[#allocation6 + $0x10] sm:$0xff] %v1385
    %1394 = vst [vmem:[#allocation6 + $0x18] sm:$0xff] %v1386
    %1395 = vst [vmem:[#allocation6 + $0x20] sm:$0xff] %v1387
    %1396 = vst [vmem:[#allocation6 + $0x28] sm:$0xff] %v1388
    %1397 = vst [vmem:[#allocation6 + $0x30] sm:$0xff] %v1389
    %1398 = vst [vmem:[#allocation6 + $0x38] sm:$0xff] %v1390
    // Predicated region
    $region30: #{tpu_custom_call.1} parent=1 // pred_check
      _
    $region31: #{tpu_custom_call.1} parent=1 // pred_check_branch
      %1400 = sbr.rel (0) target = $region33
    $region32: #{tpu_custom_call.1} parent=1 // pred_region
      %s1402 = ssub.s32 1024, 1024
      %1403 = vsyncadd [#allocation5], %s1402
      %s1404 = sshll.u32 [#allocation6], 4
      %s1405 = int_to_ptr.vmem [resolvable:$true] %s1404
      %1410 = dma.vmem_to_hbm [thread:$0]  %s1405, 1024, %s6, [#allocation5], 512, 512, 32
    $region33: #{tpu_custom_call.1} parent=1 // pred_fallthru
      _
    // Predicated region
    $region34: #{tpu_custom_call.1} parent=1 // pred_check
      _
    $region35: #{tpu_custom_call.1} parent=1 // pred_check_branch
      %1412 = sbr.rel (0) target = $region37
    $region36: #{tpu_custom_call.1} parent=1 // pred_region
      %1413 = dma.done [#allocation5], 1024
    $region37: #{tpu_custom_call.1} parent=1 // pred_fallthru
      _
    %1414 = vsyncpa [#allocation4], 1
    %1415 = vsyncpa [#allocation5], 1

</llo_original>
